<compile_context>
chip_gen: v7x
topology: tpu7x:2x2x1
jax: 0.10.0
libtpu: 0.0.40
codegen_flags: <defaults>
</compile_context>

<pallas_src>
import functools

import jax
import jax.numpy as jnp
import numpy as np
from jax import lax
from jax.experimental import pallas as pl
from jax.experimental.pallas import tpu as pltpu


# ----------------------------------------------------------------------------
# Fused kernel: per (batch, q-tile) grid step
#   x_ref   : (1, TQ, C)  bf16  query tokens
#   c_ref   : (1, Lc, C)  bf16  context tokens (block changes only with batch)
#   g_ref   : (1, C)      f32   gamma * sqrt(dim)
#   wq_ref  : (C, E)      bf16  head-major q projection (att_scale folded in)
#   wkv_ref : (C, 2E)     bf16  head-major stacked k|v projection
#   wp_ref  : (E, C)      bf16  head-major output projection
#   o_ref   : (1, TQ, C)  f32
#   kv_ref  : (Lc, 2E)    bf16  VMEM scratch: per-batch cached K|V
#   oh_ref  : (TQ, E)     bf16  VMEM scratch: per-tile all-heads attention out
# ----------------------------------------------------------------------------
def _fused_cross_attention_kernel(x_ref, c_ref, g_ref, wq_ref, wkv_ref, wp_ref,
                                  o_ref, kv_ref, oh_ref, *, num_heads, dim_head):
    f32 = jnp.float32
    bf16 = jnp.bfloat16
    E = num_heads * dim_head
    g = g_ref[...]                                              # (1, C) f32

    # --- per-batch: ChannelRMSNorm(context) + stacked K|V projection, ONCE ---
    @pl.when(pl.program_id(1) == 0)
    def _():
        c = c_ref[0].astype(f32)                                # (Lc, C)
        cn = c * lax.rsqrt(jnp.maximum(jnp.sum(c * c, axis=-1, keepdims=True),
                                       1e-24)) * g              # == F.normalize(eps=1e-12)
        kv_ref[...] = jnp.dot(cn.astype(bf16), wkv_ref[...],
                              preferred_element_type=f32).astype(bf16)

    # --- per q-tile: ChannelRMSNorm(x) + q projection (att_scale pre-folded) ---
    x = x_ref[0].astype(f32)                                    # (TQ, C)
    xn = x * lax.rsqrt(jnp.maximum(jnp.sum(x * x, axis=-1, keepdims=True),
                                   1e-24)) * g
    q = jnp.dot(xn.astype(bf16), wq_ref[...],
                preferred_element_type=f32).astype(bf16)        # (TQ, E)

    # --- per-head attention; each head's output is stored into oh_ref so the
    #     (TQ, Lc) f32 score / softmax temporaries die at the end of the head ---
    for h in range(num_heads):                                  # static unroll
        lo = h * dim_head
        qh = q[:, lo:lo + dim_head]                             # (TQ, dh)
        kh = kv_ref[:, lo:lo + dim_head]                        # (Lc, dh)
        vh = kv_ref[:, E + lo:E + lo + dim_head]                # (Lc, dh)
        # contract last dims of q and k -> no explicit k transpose
        s = lax.dot_general(qh, kh, (((1,), (1,)), ((), ())),
                            preferred_element_type=f32)         # (TQ, Lc)
        s = s - jnp.max(s, axis=-1, keepdims=True)              # f32 softmax
        p = jnp.exp(s)
        p = p * pl.reciprocal(jnp.sum(p, axis=-1, keepdims=True), approx=True)
        p = p + 1e-8
        oh = jnp.dot(p.astype(bf16), vh,
                     preferred_element_type=f32) + 1e-8         # (TQ, dh)
        oh_ref[:, lo:lo + dim_head] = oh.astype(bf16)

    # --- single merged output projection (contraction K = E, fills the MXU) ---
    o_ref[0] = jnp.dot(oh_ref[...], wp_ref[...],
                       preferred_element_type=f32).astype(o_ref.dtype)


# ----------------------------------------------------------------------------
# VMEM budgeting / tile selection
# ----------------------------------------------------------------------------
def _vmem_estimate(tq, lc, C, E):
    """Rough per-step VMEM footprint (bytes) incl. double-buffered pipeline."""
    b = 0
    b += 2 * tq * C * 2                              # x tile (bf16), 2 bufs
    b += 2 * lc * C * 2                              # context tile (bf16), 2 bufs
    b += 2 * tq * C * 4                              # out tile (f32), 2 bufs
    b += 2 * (C * E + C * 2 * E + E * C) * 2         # weights (bf16), 2 bufs
    b += 2 * C * 4                                   # gamma
    b += lc * 2 * E * 2 + tq * E * 2                 # kv + oh scratch (bf16)
    b += lc * C * 4 + lc * 2 * E * 4                 # cn / kv f32 temporaries
    b += 3 * tq * lc * 4 + tq * (E + C) * 4          # score/exp/q temporaries
    return b


def _pick_q_tile(L, Lc, C, E, budget):
    """Largest multiple-of-8 divisor of L (<= 512) whose footprint fits budget."""
    cands = [t for t in range(8, min(L, 512) + 1, 8)
             if L % t == 0 and _vmem_estimate(t, Lc, C, E) <= budget]
    if cands:
        return max(cands)
    return L  # full-extent block is always a legal BlockSpec


# ----------------------------------------------------------------------------
# Full CrossAttention forward (single Pallas kernel + layout glue)
# ----------------------------------------------------------------------------
def cross_attention(x, context, gamma, Wq, Wk, Wv, Wp, *, dim_head, num_heads):
    B, C, H, Wd = x.shape
    Bc, Cc, Hc, Wc = context.shape
    # faithful to the reference forward(): self.norm (dim-sized) is applied to
    # BOTH x and context, which requires dim_context == dim.
    assert Cc == C, "forward() applies the dim-sized norm to context"
    L, Lc = H * Wd, Hc * Wc
    E = dim_head * num_heads
    scale = float(C) ** 0.5
    att_scale = float(dim_head) ** -0.5

    g = (gamma.reshape(1, C) * scale).astype(jnp.float32)

    # head-major channel permutation: new idx h*dh+c  <-  old idx c*num_heads+h
    j = np.arange(E)
    perm = (j % dim_head) * num_heads + (j // dim_head)

    # att_scale folded into the q weights (free on the wrapper side)
    wq = (Wq[perm, :] * att_scale).T.astype(jnp.bfloat16)       # (C, E)
    wkv = jnp.concatenate([Wk[perm, :].T, Wv[perm, :].T],
                          axis=1).astype(jnp.bfloat16)          # (C, 2E)
    wp = Wp[:, perm].T.astype(jnp.bfloat16)                     # (E, C)

    # NCHW -> token layout (B, L, C); bf16 halves HBM DMA + context VMEM bytes
    x_tok = x.reshape(B, C, L).transpose(0, 2, 1).astype(jnp.bfloat16)
    c_tok = context.reshape(B, C, Lc).transpose(0, 2, 1).astype(jnp.bfloat16)

    # generation-aware VMEM sizing (v5e/v6e 128 MiB, v7x 64 MiB per TC)
    try:
        vmem_cap = int(pltpu.get_tpu_info().vmem_capacity_bytes)
    except Exception:
        vmem_cap = 64 * 1024 * 1024
    TQ = _pick_q_tile(L, Lc, C, E, budget=int(0.80 * vmem_cap))
    vmem_limit = int(min(0.90 * vmem_cap,
                         max(1.5 * _vmem_estimate(TQ, Lc, C, E),
                             32 * 1024 * 1024)))

    grid = (B, L // TQ)

    kern = functools.partial(_fused_cross_attention_kernel,
                             num_heads=num_heads, dim_head=dim_head)

    out_tok = pl.pallas_call(
        kern,
        out_shape=jax.ShapeDtypeStruct((B, L, C), jnp.float32),
        grid=grid,
        in_specs=[
            pl.BlockSpec((1, TQ, C), lambda b, qi: (b, qi, 0)),   # x tile
            pl.BlockSpec((1, Lc, C), lambda b, qi: (b, 0, 0)),    # full context
            pl.BlockSpec((1, C), lambda b, qi: (0, 0)),           # gamma*sqrt(C)
            pl.BlockSpec((C, E), lambda b, qi: (0, 0)),           # Wq^T * scale
            pl.BlockSpec((C, 2 * E), lambda b, qi: (0, 0)),       # [Wk|Wv]^T
            pl.BlockSpec((E, C), lambda b, qi: (0, 0)),           # Wp^T
        ],
        out_specs=pl.BlockSpec((1, TQ, C), lambda b, qi: (b, qi, 0)),
        scratch_shapes=[
            pltpu.VMEM((Lc, 2 * E), jnp.bfloat16),                # cached K|V
            pltpu.VMEM((TQ, E), jnp.bfloat16),                    # all-heads out
        ],
        compiler_params=pltpu.CompilerParams(
            dimension_semantics=("parallel", "arbitrary"),
            vmem_limit_bytes=vmem_limit),
    )(x_tok, c_tok, g, wq, wkv, wp)

    return out_tok.transpose(0, 2, 1).reshape(B, C, H, Wd)


# ----------------------------------------------------------------------------
# Pure-JAX f32 reference (mirrors the PyTorch code, NCHW)
# ----------------------------------------------------------------------------
def reference(x, context, gamma, Wq, Wk, Wv, Wp, *, dim_head, num_heads):
    C = x.shape[1]
    scale = float(C) ** 0.5
    att_scale = float(dim_head) ** -0.5
    hp = lax.Precision.HIGHEST

    def norm(t):
        n = jnp.sqrt(jnp.sum(t * t, axis=1, keepdims=True))
        return t / jnp.maximum(n, 1e-12) * scale * gamma[None, :, None, None]

    xn, cn = norm(x), norm(context)
    q = jnp.einsum('oi,bihw->bohw', Wq, xn, precision=hp)
    k = jnp.einsum('oi,bihw->bohw', Wk, cn, precision=hp)
    v = jnp.einsum('oi,bihw->bohw', Wv, cn, precision=hp)

    def split(t):
        Bt, Et, Ht, Wt = t.shape
        return (t.reshape(Bt, dim_head, num_heads, Ht, Wt)
                 .transpose(0, 2, 3, 4, 1)
                 .reshape(Bt * num_heads, Ht * Wt, dim_head))

    qh, kh, vh = split(q), split(k), split(v)
    s = jnp.einsum('bmc,bnc->bmn', qh, kh, precision=hp) * att_scale
    p = jax.nn.softmax(s, axis=-1) + 1e-8
    a = jnp.einsum('bmn,bnc->bmc', p, vh, precision=hp) + 1e-8

    B, _, H, Wd = x.shape
    a = (a.reshape(B, num_heads, H, Wd, dim_head)
          .transpose(0, 4, 1, 2, 3)
          .reshape(B, dim_head * num_heads, H, Wd))
    return jnp.einsum('oi,bihw->bohw', Wp, a, precision=hp)


if __name__ == "__main__":
    # Small shapes: dim == dim_context (required by the original forward).
    B, dim, H, W = 2, 8, 8, 8
    dim_context, Hc, Wc = 8, 8, 8
    dim_head, num_heads = 8, 4
    dim_embed = dim_head * num_heads

    key = jax.random.PRNGKey(0)
    kx, kc, kq, kk, kv, kp = jax.random.split(key, 6)

    x = jax.random.normal(kx, (B, dim, H, W), jnp.float32)
    context = jax.random.normal(kc, (B, dim_context, Hc, Wc), jnp.float32)

    gamma = jnp.ones((dim,), jnp.float32)                      # torch.ones(dim,1,1)
    Wq = jax.random.normal(kq, (dim_embed, dim), jnp.float32) * 0.05
    Wk = jax.random.normal(kk, (dim_embed, dim_context), jnp.float32) * 0.05
    Wv = jax.random.normal(kv, (dim_embed, dim_context), jnp.float32) * 0.05
    Wp = jax.random.normal(kp, (dim, dim_embed), jnp.float32) * 0.05

    out = cross_attention(x, context, gamma, Wq, Wk, Wv, Wp,
                          dim_head=dim_head, num_heads=num_heads)
    out = jax.block_until_ready(out)

    ref = reference(x, context, gamma, Wq, Wk, Wv, Wp,
                    dim_head=dim_head, num_heads=num_heads)

    assert out.shape == (B, dim, H, W)
    # bf16 inputs + bf16 MXU operands + approx softmax reciprocal vs. f32 HIGHEST
    np.testing.assert_allclose(np.asarray(out), np.asarray(ref),
                               rtol=2e-2, atol=2e-3)
    print("KERNEL_OK")
</pallas_src>

<mosaic_0001>
module attributes {stable_mosaic.version = 11 : i64} {
  func.func @_fused_cross_attention_kernel(%arg0: i32, %arg1: i32, %arg2: memref<1x64x8xbf16, #tpu.memory_space<vmem>>, %arg3: memref<1x64x8xbf16, #tpu.memory_space<vmem>>, %arg4: memref<1x8xf32, #tpu.memory_space<vmem>>, %arg5: memref<8x32xbf16, #tpu.memory_space<vmem>>, %arg6: memref<8x64xbf16, #tpu.memory_space<vmem>>, %arg7: memref<32x8xbf16, #tpu.memory_space<vmem>>, %arg8: memref<1x64x8xf32, #tpu.memory_space<vmem>>, %arg9: memref<64x64xbf16, #tpu.memory_space<vmem>>, %arg10: memref<64x32xbf16, #tpu.memory_space<vmem>>) attributes {dimension_semantics = [#tpu.dimension_semantics<parallel>, #tpu.dimension_semantics<arbitrary>], iteration_bounds = array<i64: 2, 1>, scalar_prefetch = 0 : i64, scratch_operands = 2 : i64, tpu.core_type = #tpu.core_type<tc>, window_params = [{transform_indices = @transform_0, window_bounds = array<i64: 1, 64, 8>}, {transform_indices = @transform_1, window_bounds = array<i64: 1, 64, 8>}, {pipeline_mode = #tpu.pipeline_mode<synchronous>, transform_indices = @transform_2, window_bounds = array<i64: 1, 8>}, {pipeline_mode = #tpu.pipeline_mode<synchronous>, transform_indices = @transform_3, window_bounds = array<i64: 8, 32>}, {pipeline_mode = #tpu.pipeline_mode<synchronous>, transform_indices = @transform_4, window_bounds = array<i64: 8, 64>}, {pipeline_mode = #tpu.pipeline_mode<synchronous>, transform_indices = @transform_5, window_bounds = array<i64: 32, 8>}, {transform_indices = @transform_6, window_bounds = array<i64: 1, 64, 8>}]} {
    %c0 = arith.constant 0 : index
    %c0_0 = arith.constant 0 : index
    %0 = vector.load %arg4[%c0, %c0_0] : memref<1x8xf32, #tpu.memory_space<vmem>>, vector<1x8xf32>
    %c0_i32 = arith.constant 0 : i32
    %1 = arith.cmpi eq, %arg1, %c0_i32 : i32
    %2 = arith.extui %1 : i1 to i32
    %c0_i32_1 = arith.constant 0 : i32
    %3 = arith.cmpi ne, %2, %c0_i32_1 : i32
    scf.if %3 {
      %c0_58 = arith.constant 0 : index
      %c0_59 = arith.constant 0 : index
      %c0_60 = arith.constant 0 : index
      %115 = vector.load %arg3[%c0_58, %c0_59, %c0_60] : memref<1x64x8xbf16, #tpu.memory_space<vmem>>, vector<1x64x8xbf16>
      %116 = vector.shape_cast %115 : vector<1x64x8xbf16> to vector<64x8xbf16>
      %117 = arith.extf %116 : vector<64x8xbf16> to vector<64x8xf32>
      %118 = arith.mulf %117, %117 : vector<64x8xf32>
      %cst_61 = arith.constant dense<0.000000e+00> : vector<64xf32>
      %119 = vector.multi_reduction <add>, %118, %cst_61 [1] : vector<64x8xf32> to vector<64xf32>
      %120 = vector.shape_cast %119 : vector<64xf32> to vector<64x1xf32>
      %cst_62 = arith.constant 1.000000e-24 : f32
      %121 = vector.broadcast %cst_62 : f32 to vector<64x1xf32>
      %122 = arith.maximumf %120, %121 : vector<64x1xf32>
      %123 = math.rsqrt %122 : vector<64x1xf32>
      %124 = vector.broadcast %123 : vector<64x1xf32> to vector<64x8xf32>
      %125 = arith.mulf %117, %124 : vector<64x8xf32>
      %126 = vector.broadcast %0 : vector<1x8xf32> to vector<64x8xf32>
      %127 = arith.mulf %125, %126 : vector<64x8xf32>
      %128 = arith.truncf %127 : vector<64x8xf32> to vector<64x8xbf16>
      %c0_63 = arith.constant 0 : index
      %c0_64 = arith.constant 0 : index
      %129 = vector.load %arg6[%c0_63, %c0_64] : memref<8x64xbf16, #tpu.memory_space<vmem>>, vector<8x64xbf16>
      %cst_65 = arith.constant dense<0.000000e+00> : vector<64x64xf32>
      %130 = tpu.matmul %128, %129, %cst_65 {dimension_numbers = #tpu.dot_dimension_numbers<[1], [0], [0], [1], [0, 0, 1, 1], [], []>} : vector<64x8xbf16>, vector<8x64xbf16>, vector<64x64xf32> -> vector<64x64xf32>
      %131 = arith.truncf %130 : vector<64x64xf32> to vector<64x64xbf16>
      %c0_66 = arith.constant 0 : index
      %c0_67 = arith.constant 0 : index
      %132 = vector.load %arg9[%c0_66, %c0_67] : memref<64x64xbf16, #tpu.memory_space<vmem>>, vector<64x64xbf16>
      tpu.vector_store %arg9[%c0_66, %c0_67], %131 {strides = array<i32>} : memref<64x64xbf16, #tpu.memory_space<vmem>>, vector<64x64xbf16>,
    } else {
    }
    %c0_2 = arith.constant 0 : index
    %c0_3 = arith.constant 0 : index
    %c0_4 = arith.constant 0 : index
    %4 = vector.load %arg2[%c0_2, %c0_3, %c0_4] : memref<1x64x8xbf16, #tpu.memory_space<vmem>>, vector<1x64x8xbf16>
    %5 = vector.shape_cast %4 : vector<1x64x8xbf16> to vector<64x8xbf16>
    %6 = arith.extf %5 : vector<64x8xbf16> to vector<64x8xf32>
    %7 = arith.mulf %6, %6 : vector<64x8xf32>
    %cst = arith.constant dense<0.000000e+00> : vector<64xf32>
    %8 = vector.multi_reduction <add>, %7, %cst [1] : vector<64x8xf32> to vector<64xf32>
    %9 = vector.shape_cast %8 : vector<64xf32> to vector<64x1xf32>
    %cst_5 = arith.constant 1.000000e-24 : f32
    %10 = vector.broadcast %cst_5 : f32 to vector<64x1xf32>
    %11 = arith.maximumf %9, %10 : vector<64x1xf32>
    %12 = math.rsqrt %11 : vector<64x1xf32>
    %13 = vector.broadcast %12 : vector<64x1xf32> to vector<64x8xf32>
    %14 = arith.mulf %6, %13 : vector<64x8xf32>
    %15 = vector.broadcast %0 : vector<1x8xf32> to vector<64x8xf32>
    %16 = arith.mulf %14, %15 : vector<64x8xf32>
    %17 = arith.truncf %16 : vector<64x8xf32> to vector<64x8xbf16>
    %c0_6 = arith.constant 0 : index
    %c0_7 = arith.constant 0 : index
    %18 = vector.load %arg5[%c0_6, %c0_7] : memref<8x32xbf16, #tpu.memory_space<vmem>>, vector<8x32xbf16>
    %cst_8 = arith.constant dense<0.000000e+00> : vector<64x32xf32>
    %19 = tpu.matmul %17, %18, %cst_8 {dimension_numbers = #tpu.dot_dimension_numbers<[1], [0], [0], [1], [0, 0, 1, 1], [], []>} : vector<64x8xbf16>, vector<8x32xbf16>, vector<64x32xf32> -> vector<64x32xf32>
    %20 = arith.truncf %19 : vector<64x32xf32> to vector<64x32xbf16>
    %21 = vector.extract_strided_slice %20 {offsets = [0, 0], sizes = [64, 8], strides = [1, 1]} : vector<64x32xbf16> to vector<64x8xbf16>
    %c0_9 = arith.constant 0 : index
    %c0_10 = arith.constant 0 : index
    %22 = vector.load %arg9[%c0_9, %c0_10] : memref<64x64xbf16, #tpu.memory_space<vmem>>, vector<64x8xbf16>
    %c0_11 = arith.constant 0 : index
    %c32 = arith.constant 32 : index
    %23 = vector.load %arg9[%c0_11, %c32] : memref<64x64xbf16, #tpu.memory_space<vmem>>, vector<64x8xbf16>
    %cst_12 = arith.constant dense<0.000000e+00> : vector<64x64xf32>
    %24 = tpu.matmul %21, %22, %cst_12 {dimension_numbers = #tpu.dot_dimension_numbers<[1], [1], [0], [0], [0, 0, 1, 0], [], []>} : vector<64x8xbf16>, vector<64x8xbf16>, vector<64x64xf32> -> vector<64x64xf32>
    %cst_13 = arith.constant dense<0xFF800000> : vector<64xf32>
    %25 = vector.multi_reduction <maximumf>, %24, %cst_13 [1] : vector<64x64xf32> to vector<64xf32>
    %26 = vector.shape_cast %25 : vector<64xf32> to vector<64x1xf32>
    %27 = vector.broadcast %26 : vector<64x1xf32> to vector<64x64xf32>
    %28 = arith.subf %24, %27 : vector<64x64xf32>
    %29 = math.exp %28 : vector<64x64xf32>
    %cst_14 = arith.constant dense<0.000000e+00> : vector<64xf32>
    %30 = vector.multi_reduction <add>, %29, %cst_14 [1] : vector<64x64xf32> to vector<64xf32>
    %31 = vector.shape_cast %30 : vector<64xf32> to vector<64x1xf32>
    %32 = tpu.reciprocal %31 {approx = true} : vector<64x1xf32> -> vector<64x1xf32>
    %33 = vector.broadcast %32 : vector<64x1xf32> to vector<64x64xf32>
    %34 = arith.mulf %29, %33 : vector<64x64xf32>
    %cst_15 = arith.constant 9.99999993E-9 : f32
    %35 = vector.broadcast %cst_15 : f32 to vector<64x64xf32>
    %36 = arith.addf %34, %35 : vector<64x64xf32>
    %37 = arith.truncf %36 : vector<64x64xf32> to vector<64x64xbf16>
    %cst_16 = arith.constant dense<0.000000e+00> : vector<64x8xf32>
    %38 = tpu.matmul %37, %23, %cst_16 {dimension_numbers = #tpu.dot_dimension_numbers<[1], [0], [0], [1], [0, 0, 1, 1], [], []>} : vector<64x64xbf16>, vector<64x8xbf16>, vector<64x8xf32> -> vector<64x8xf32>
    %cst_17 = arith.constant 9.99999993E-9 : f32
    %39 = vector.broadcast %cst_17 : f32 to vector<64x8xf32>
    %40 = arith.addf %38, %39 : vector<64x8xf32>
    %41 = arith.truncf %40 : vector<64x8xf32> to vector<64x8xbf16>
    %c0_18 = arith.constant 0 : index
    %c0_19 = arith.constant 0 : index
    %42 = vector.load %arg10[%c0_18, %c0_19] : memref<64x32xbf16, #tpu.memory_space<vmem>>, vector<64x8xbf16>
    tpu.vector_store %arg10[%c0_18, %c0_19], %41 {strides = array<i32>} : memref<64x32xbf16, #tpu.memory_space<vmem>>, vector<64x8xbf16>,
    %43 = vector.extract_strided_slice %20 {offsets = [0, 8], sizes = [64, 8], strides = [1, 1]} : vector<64x32xbf16> to vector<64x8xbf16>
    %c0_20 = arith.constant 0 : index
    %c8 = arith.constant 8 : index
    %44 = vector.load %arg9[%c0_20, %c8] : memref<64x64xbf16, #tpu.memory_space<vmem>>, vector<64x8xbf16>
    %c0_21 = arith.constant 0 : index
    %c40 = arith.constant 40 : index
    %45 = vector.load %arg9[%c0_21, %c40] : memref<64x64xbf16, #tpu.memory_space<vmem>>, vector<64x8xbf16>
    %cst_22 = arith.constant dense<0.000000e+00> : vector<64x64xf32>
    %46 = tpu.matmul %43, %44, %cst_22 {dimension_numbers = #tpu.dot_dimension_numbers<[1], [1], [0], [0], [0, 0, 1, 0], [], []>} : vector<64x8xbf16>, vector<64x8xbf16>, vector<64x64xf32> -> vector<64x64xf32>
    %cst_23 = arith.constant dense<0xFF800000> : vector<64xf32>
    %47 = vector.multi_reduction <maximumf>, %46, %cst_23 [1] : vector<64x64xf32> to vector<64xf32>
    %48 = vector.shape_cast %47 : vector<64xf32> to vector<64x1xf32>
    %49 = vector.broadcast %48 : vector<64x1xf32> to vector<64x64xf32>
    %50 = arith.subf %46, %49 : vector<64x64xf32>
    %51 = math.exp %50 : vector<64x64xf32>
    %cst_24 = arith.constant dense<0.000000e+00> : vector<64xf32>
    %52 = vector.multi_reduction <add>, %51, %cst_24 [1] : vector<64x64xf32> to vector<64xf32>
    %53 = vector.shape_cast %52 : vector<64xf32> to vector<64x1xf32>
    %54 = tpu.reciprocal %53 {approx = true} : vector<64x1xf32> -> vector<64x1xf32>
    %55 = vector.broadcast %54 : vector<64x1xf32> to vector<64x64xf32>
    %56 = arith.mulf %51, %55 : vector<64x64xf32>
    %cst_25 = arith.constant 9.99999993E-9 : f32
    %57 = vector.broadcast %cst_25 : f32 to vector<64x64xf32>
    %58 = arith.addf %56, %57 : vector<64x64xf32>
    %59 = arith.truncf %58 : vector<64x64xf32> to vector<64x64xbf16>
    %cst_26 = arith.constant dense<0.000000e+00> : vector<64x8xf32>
    %60 = tpu.matmul %59, %45, %cst_26 {dimension_numbers = #tpu.dot_dimension_numbers<[1], [0], [0], [1], [0, 0, 1, 1], [], []>} : vector<64x64xbf16>, vector<64x8xbf16>, vector<64x8xf32> -> vector<64x8xf32>
    %cst_27 = arith.constant 9.99999993E-9 : f32
    %61 = vector.broadcast %cst_27 : f32 to vector<64x8xf32>
    %62 = arith.addf %60, %61 : vector<64x8xf32>
    %63 = arith.truncf %62 : vector<64x8xf32> to vector<64x8xbf16>
    %c0_28 = arith.constant 0 : index
    %c8_29 = arith.constant 8 : index
    %64 = vector.load %arg10[%c0_28, %c8_29] : memref<64x32xbf16, #tpu.memory_space<vmem>>, vector<64x8xbf16>
    tpu.vector_store %arg10[%c0_28, %c8_29], %63 {strides = array<i32>} : memref<64x32xbf16, #tpu.memory_space<vmem>>, vector<64x8xbf16>,
    %65 = vector.extract_strided_slice %20 {offsets = [0, 16], sizes = [64, 8], strides = [1, 1]} : vector<64x32xbf16> to vector<64x8xbf16>
    %c0_30 = arith.constant 0 : index
    %c16 = arith.constant 16 : index
    %66 = vector.load %arg9[%c0_30, %c16] : memref<64x64xbf16, #tpu.memory_space<vmem>>, vector<64x8xbf16>
    %c0_31 = arith.constant 0 : index
    %c48 = arith.constant 48 : index
    %67 = vector.load %arg9[%c0_31, %c48] : memref<64x64xbf16, #tpu.memory_space<vmem>>, vector<64x8xbf16>
    %cst_32 = arith.constant dense<0.000000e+00> : vector<64x64xf32>
    %68 = tpu.matmul %65, %66, %cst_32 {dimension_numbers = #tpu.dot_dimension_numbers<[1], [1], [0], [0], [0, 0, 1, 0], [], []>} : vector<64x8xbf16>, vector<64x8xbf16>, vector<64x64xf32> -> vector<64x64xf32>
    %cst_33 = arith.constant dense<0xFF800000> : vector<64xf32>
    %69 = vector.multi_reduction <maximumf>, %68, %cst_33 [1] : vector<64x64xf32> to vector<64xf32>
    %70 = vector.shape_cast %69 : vector<64xf32> to vector<64x1xf32>
    %71 = vector.broadcast %70 : vector<64x1xf32> to vector<64x64xf32>
    %72 = arith.subf %68, %71 : vector<64x64xf32>
    %73 = math.exp %72 : vector<64x64xf32>
    %cst_34 = arith.constant dense<0.000000e+00> : vector<64xf32>
    %74 = vector.multi_reduction <add>, %73, %cst_34 [1] : vector<64x64xf32> to vector<64xf32>
    %75 = vector.shape_cast %74 : vector<64xf32> to vector<64x1xf32>
    %76 = tpu.reciprocal %75 {approx = true} : vector<64x1xf32> -> vector<64x1xf32>
    %77 = vector.broadcast %76 : vector<64x1xf32> to vector<64x64xf32>
    %78 = arith.mulf %73, %77 : vector<64x64xf32>
    %cst_35 = arith.constant 9.99999993E-9 : f32
    %79 = vector.broadcast %cst_35 : f32 to vector<64x64xf32>
    %80 = arith.addf %78, %79 : vector<64x64xf32>
    %81 = arith.truncf %80 : vector<64x64xf32> to vector<64x64xbf16>
    %cst_36 = arith.constant dense<0.000000e+00> : vector<64x8xf32>
    %82 = tpu.matmul %81, %67, %cst_36 {dimension_numbers = #tpu.dot_dimension_numbers<[1], [0], [0], [1], [0, 0, 1, 1], [], []>} : vector<64x64xbf16>, vector<64x8xbf16>, vector<64x8xf32> -> vector<64x8xf32>
    %cst_37 = arith.constant 9.99999993E-9 : f32
    %83 = vector.broadcast %cst_37 : f32 to vector<64x8xf32>
    %84 = arith.addf %82, %83 : vector<64x8xf32>
    %85 = arith.truncf %84 : vector<64x8xf32> to vector<64x8xbf16>
    %c0_38 = arith.constant 0 : index
    %c16_39 = arith.constant 16 : index
    %86 = vector.load %arg10[%c0_38, %c16_39] : memref<64x32xbf16, #tpu.memory_space<vmem>>, vector<64x8xbf16>
    tpu.vector_store %arg10[%c0_38, %c16_39], %85 {strides = array<i32>} : memref<64x32xbf16, #tpu.memory_space<vmem>>, vector<64x8xbf16>,
    %87 = vector.extract_strided_slice %20 {offsets = [0, 24], sizes = [64, 8], strides = [1, 1]} : vector<64x32xbf16> to vector<64x8xbf16>
    %c0_40 = arith.constant 0 : index
    %c24 = arith.constant 24 : index
    %88 = vector.load %arg9[%c0_40, %c24] : memref<64x64xbf16, #tpu.memory_space<vmem>>, vector<64x8xbf16>
    %c0_41 = arith.constant 0 : index
    %c56 = arith.constant 56 : index
    %89 = vector.load %arg9[%c0_41, %c56] : memref<64x64xbf16, #tpu.memory_space<vmem>>, vector<64x8xbf16>
    %cst_42 = arith.constant dense<0.000000e+00> : vector<64x64xf32>
    %90 = tpu.matmul %87, %88, %cst_42 {dimension_numbers = #tpu.dot_dimension_numbers<[1], [1], [0], [0], [0, 0, 1, 0], [], []>} : vector<64x8xbf16>, vector<64x8xbf16>, vector<64x64xf32> -> vector<64x64xf32>
    %cst_43 = arith.constant dense<0xFF800000> : vector<64xf32>
    %91 = vector.multi_reduction <maximumf>, %90, %cst_43 [1] : vector<64x64xf32> to vector<64xf32>
    %92 = vector.shape_cast %91 : vector<64xf32> to vector<64x1xf32>
    %93 = vector.broadcast %92 : vector<64x1xf32> to vector<64x64xf32>
    %94 = arith.subf %90, %93 : vector<64x64xf32>
    %95 = math.exp %94 : vector<64x64xf32>
    %cst_44 = arith.constant dense<0.000000e+00> : vector<64xf32>
    %96 = vector.multi_reduction <add>, %95, %cst_44 [1] : vector<64x64xf32> to vector<64xf32>
    %97 = vector.shape_cast %96 : vector<64xf32> to vector<64x1xf32>
    %98 = tpu.reciprocal %97 {approx = true} : vector<64x1xf32> -> vector<64x1xf32>
    %99 = vector.broadcast %98 : vector<64x1xf32> to vector<64x64xf32>
    %100 = arith.mulf %95, %99 : vector<64x64xf32>
    %cst_45 = arith.constant 9.99999993E-9 : f32
    %101 = vector.broadcast %cst_45 : f32 to vector<64x64xf32>
    %102 = arith.addf %100, %101 : vector<64x64xf32>
    %103 = arith.truncf %102 : vector<64x64xf32> to vector<64x64xbf16>
    %cst_46 = arith.constant dense<0.000000e+00> : vector<64x8xf32>
    %104 = tpu.matmul %103, %89, %cst_46 {dimension_numbers = #tpu.dot_dimension_numbers<[1], [0], [0], [1], [0, 0, 1, 1], [], []>} : vector<64x64xbf16>, vector<64x8xbf16>, vector<64x8xf32> -> vector<64x8xf32>
    %cst_47 = arith.constant 9.99999993E-9 : f32
    %105 = vector.broadcast %cst_47 : f32 to vector<64x8xf32>
    %106 = arith.addf %104, %105 : vector<64x8xf32>
    %107 = arith.truncf %106 : vector<64x8xf32> to vector<64x8xbf16>
    %c0_48 = arith.constant 0 : index
    %c24_49 = arith.constant 24 : index
    %108 = vector.load %arg10[%c0_48, %c24_49] : memref<64x32xbf16, #tpu.memory_space<vmem>>, vector<64x8xbf16>
    tpu.vector_store %arg10[%c0_48, %c24_49], %107 {strides = array<i32>} : memref<64x32xbf16, #tpu.memory_space<vmem>>, vector<64x8xbf16>,
    %c0_50 = arith.constant 0 : index
    %c0_51 = arith.constant 0 : index
    %109 = vector.load %arg10[%c0_50, %c0_51] : memref<64x32xbf16, #tpu.memory_space<vmem>>, vector<64x32xbf16>
    %c0_52 = arith.constant 0 : index
    %c0_53 = arith.constant 0 : index
    %110 = vector.load %arg7[%c0_52, %c0_53] : memref<32x8xbf16, #tpu.memory_space<vmem>>, vector<32x8xbf16>
    %cst_54 = arith.constant dense<0.000000e+00> : vector<64x8xf32>
    %111 = tpu.matmul %109, %110, %cst_54 {dimension_numbers = #tpu.dot_dimension_numbers<[1], [0], [0], [1], [0, 0, 1, 1], [], []>} : vector<64x32xbf16>, vector<32x8xbf16>, vector<64x8xf32> -> vector<64x8xf32>
    %c0_55 = arith.constant 0 : index
    %c0_56 = arith.constant 0 : index
    %c0_57 = arith.constant 0 : index
    %112 = vector.load %arg8[%c0_55, %c0_56, %c0_57] : memref<1x64x8xf32, #tpu.memory_space<vmem>>, vector<1x64x8xf32>
    %113 = vector.shape_cast %112 : vector<1x64x8xf32> to vector<64x8xf32>
    %114 = vector.shape_cast %111 : vector<64x8xf32> to vector<1x64x8xf32>
    tpu.vector_store %arg8[%c0_55, %c0_56, %c0_57], %114 {strides = array<i32>} : memref<1x64x8xf32, #tpu.memory_space<vmem>>, vector<1x64x8xf32>,
    return
  }
  func.func @transform_0(%arg0: i32, %arg1: i32) -> (i32, i32, i32) {
    %c0_i32 = arith.constant 0 : i32
    %c0_i32_0 = arith.constant 0 : i32
    return %arg0, %arg1, %c0_i32 : i32, i32, i32
  }
  func.func @transform_1(%arg0: i32, %arg1: i32) -> (i32, i32, i32) {
    %c0_i32 = arith.constant 0 : i32
    %c0_i32_0 = arith.constant 0 : i32
    %c0_i32_1 = arith.constant 0 : i32
    return %arg0, %c0_i32, %c0_i32_0 : i32, i32, i32
  }
  func.func @transform_2(%arg0: i32, %arg1: i32) -> (i32, i32) {
    %c0_i32 = arith.constant 0 : i32
    %c0_i32_0 = arith.constant 0 : i32
    %c0_i32_1 = arith.constant 0 : i32
    return %c0_i32, %c0_i32_0 : i32, i32
  }
  func.func @transform_3(%arg0: i32, %arg1: i32) -> (i32, i32) {
    %c0_i32 = arith.constant 0 : i32
    %c0_i32_0 = arith.constant 0 : i32
    %c0_i32_1 = arith.constant 0 : i32
    return %c0_i32, %c0_i32_0 : i32, i32
  }
  func.func @transform_4(%arg0: i32, %arg1: i32) -> (i32, i32) {
    %c0_i32 = arith.constant 0 : i32
    %c0_i32_0 = arith.constant 0 : i32
    %c0_i32_1 = arith.constant 0 : i32
    return %c0_i32, %c0_i32_0 : i32, i32
  }
  func.func @transform_5(%arg0: i32, %arg1: i32) -> (i32, i32) {
    %c0_i32 = arith.constant 0 : i32
    %c0_i32_0 = arith.constant 0 : i32
    %c0_i32_1 = arith.constant 0 : i32
    return %c0_i32, %c0_i32_0 : i32, i32
  }
  func.func @transform_6(%arg0: i32, %arg1: i32) -> (i32, i32, i32) {
    %c0_i32 = arith.constant 0 : i32
    %c0_i32_0 = arith.constant 0 : i32
    return %arg0, %arg1, %c0_i32 : i32, i32, i32
  }
}

</mosaic_0001>

<llo_original>
// kernel: tpu_custom_call.1
$region0: #{tpu_custom_call.1}
  #allocation0 [shape = 'u32[]', space=smem, size = 0x4, offset = 0x4, fixed_abs, tag = 'smem constant byte address 0x4 - core index']
  #allocation1 [shape = 'u32[144,128]{1,0:T(1,128)}', space=vmem, size = 0x12000, scoped, tag = 'internal scratch']
  #allocation2 [shape = 'bf16[64,64]{1,0:T(16,128)(2,1)}', space=vmem, size = 0x4000, scoped, tag = 'scratch operand']
  #allocation3 [shape = 'bf16[64,32]{1,0:T(16,128)(2,1)}', space=vmem, size = 0x4000, scoped, tag = 'scratch operand']
  %s0 = inlined_call_operand.vmem [shape: bf16[2,64,8], index: 0, kind: input, shape index: {}]
  %s1 = inlined_call_operand.vmem [shape: bf16[2,64,8], index: 1, kind: input, shape index: {}]
  %s2 = inlined_call_operand.vmem [shape: f32[1,8], index: 2, kind: input, shape index: {}]
  %s3 = inlined_call_operand.vmem [shape: bf16[8,32], index: 3, kind: input, shape index: {}]
  %s4 = inlined_call_operand.vmem [shape: bf16[8,64], index: 4, kind: input, shape index: {}]
  %s5 = inlined_call_operand.vmem [shape: bf16[32,8], index: 5, kind: input, shape index: {}]
  %s6 = inlined_call_operand.vmem [shape: f32[2,64,8], index: 6, kind: output, shape index: {}]
  %s7 = sld [smem:[#allocation0]]
  $region61: #{tpu_custom_call.1} parent=0
    _
  %s9 = ssub.s32 1, %s7
  %s10 = scalar_select 0, %s9, %s7
  loop: start=0, step=1, limit=4
  $region2: #{tpu_custom_call.1} parent=0 // loop_pre_header
    _
  $region3: #{tpu_custom_call.1} parent=0 // loop_header
    %s12 = sphi 0, %s16
    %p13 = scmp.ge.s32.totalorder %s12, 4
    %s19 = sphi 0, %s31
    %s20 = sphi 0, %s27
    %s21 = sphi 0, %s19
    %s22 = sphi 0, %s20
    %s23 = sphi 0, %s21
    %s24 = sphi 0, %s22
    %s36 = sphi 0, %s38
    %s39 = sphi 0, %s36
    %s40 = sphi 0, %s39
    %s56 = sphi 0, %s40
    %s62 = sphi 0, %s64
    %s65 = sphi 0, %s62
    %s66 = sphi 0, %s65
    %s82 = sphi 0, %s66
    %s86 = sphi 0, %s86
    %s88 = sphi 0, %s86
    %s89 = sphi 0, %s88
    %s103 = sphi 0, %s89
    %s107 = sphi 0, %s107
    %s109 = sphi 0, %s107
    %s110 = sphi 0, %s109
    %s124 = sphi 0, %s110
    %s128 = sphi 0, %s128
    %s130 = sphi 0, %s128
    %s131 = sphi 0, %s130
    %s145 = sphi 0, %s131
    %s149 = sphi 0, %s149
    %s151 = sphi 0, %s149
    %s152 = sphi 0, %s151
    %s166 = sphi 0, %s152
    %s174 = sphi 0, %s176
    %s177 = sphi 0, %s174
    %s178 = sphi 0, %s177
    %s194 = sphi 0, %s178
  $region4: #{tpu_custom_call.1} parent=0 // loop_header_branch
    %15 = sbr.rel (%p13) target = $region8
  $region5: #{tpu_custom_call.1} parent=0 // loop_body
    %s17 = ssub.s32 %s12, 1
    %s18 = ssub.s32 %s12, 2
    %s25 = sadd.s32 1, %s20
    %p26 = scmp.ge.s32.totalorder %s25, 1
    %s27 = scalar_select %p26, 0, %s25
    %s28 = sadd.s32 1, %s19
    %s29 = scalar_select %p26, %s28, %s19
    %p30 = scmp.ge.s32.totalorder %s29, 2
    %s31 = scalar_select %p30, 0, %s29
    %s32 = ssub.s32 %s19, %s31
    %s33 = ssub.s32 %s20, %s27
    %s34 = sor.u32 %s32, %s33
    %p35 = scmp.eq.s32.totalorder %s34, 0
    %s37 = sadd.s32 %s36, 1
    %s38 = scalar_select %p35, %s36, %s37
    %p41 = pneg %p35
    %p42 = scmp.eq.s32.totalorder %s12, 1
    %p43 = por %p41, %p42
    %p44 = scmp.ne.s32.totalorder %s36, %s39
    %p45 = scmp.eq.s32.totalorder %s12, 0
    %p46 = por %p44, %p45
    %p47 = scmp.ne.s32.totalorder %s36, %s39
    %p48 = scmp.eq.s32.totalorder %s17, 1
    %p49 = por %p47, %p48
    %p50 = scmp.ne.s32.totalorder %s39, %s40
    %p51 = scmp.eq.s32.totalorder %s17, 0
    %p52 = por %p50, %p51
    %p53 = scmp.ne.s32.totalorder %s39, %s40
    %p54 = scmp.eq.s32.totalorder %s18, 1
    %p55 = por %p53, %p54
    %p57 = scmp.ne.s32.totalorder %s40, %s56
    %p58 = scmp.eq.s32.totalorder %s18, 0
    %p59 = por %p57, %p58
    %s60 = ssub.s32 %s19, %s31
    %p61 = scmp.eq.s32.totalorder %s60, 0
    %s63 = sadd.s32 %s62, 1
    %s64 = scalar_select %p61, %s62, %s63
    %p67 = pneg %p61
    %p68 = scmp.eq.s32.totalorder %s12, 1
    %p69 = por %p67, %p68
    %p70 = scmp.ne.s32.totalorder %s62, %s65
    %p71 = scmp.eq.s32.totalorder %s12, 0
    %p72 = por %p70, %p71
    %p73 = scmp.ne.s32.totalorder %s62, %s65
    %p74 = scmp.eq.s32.totalorder %s17, 1
    %p75 = por %p73, %p74
    %p76 = scmp.ne.s32.totalorder %s65, %s66
    %p77 = scmp.eq.s32.totalorder %s17, 0
    %p78 = por %p76, %p77
    %p79 = scmp.ne.s32.totalorder %s65, %s66
    %p80 = scmp.eq.s32.totalorder %s18, 1
    %p81 = por %p79, %p80
    %p83 = scmp.ne.s32.totalorder %s66, %s82
    %p84 = scmp.eq.s32.totalorder %s18, 0
    %p85 = por %p83, %p84
    %s87 = sadd.s32 %s86, 1
    %p90 = scmp.eq.s32.totalorder %s12, 1
    %p91 = scmp.ne.s32.totalorder %s86, %s88
    %p92 = scmp.eq.s32.totalorder %s12, 0
    %p93 = por %p91, %p92
    %p94 = scmp.ne.s32.totalorder %s86, %s88
    %p95 = scmp.eq.s32.totalorder %s17, 1
    %p96 = por %p94, %p95
    %p97 = scmp.ne.s32.totalorder %s88, %s89
    %p98 = scmp.eq.s32.totalorder %s17, 0
    %p99 = por %p97, %p98
    %p100 = scmp.ne.s32.totalorder %s88, %s89
    %p101 = scmp.eq.s32.totalorder %s18, 1
    %p102 = por %p100, %p101
    %p104 = scmp.ne.s32.totalorder %s89, %s103
    %p105 = scmp.eq.s32.totalorder %s18, 0
    %p106 = por %p104, %p105
    %s108 = sadd.s32 %s107, 1
    %p111 = scmp.eq.s32.totalorder %s12, 1
    %p112 = scmp.ne.s32.totalorder %s107, %s109
    %p113 = scmp.eq.s32.totalorder %s12, 0
    %p114 = por %p112, %p113
    %p115 = scmp.ne.s32.totalorder %s107, %s109
    %p116 = scmp.eq.s32.totalorder %s17, 1
    %p117 = por %p115, %p116
    %p118 = scmp.ne.s32.totalorder %s109, %s110
    %p119 = scmp.eq.s32.totalorder %s17, 0
    %p120 = por %p118, %p119
    %p121 = scmp.ne.s32.totalorder %s109, %s110
    %p122 = scmp.eq.s32.totalorder %s18, 1
    %p123 = por %p121, %p122
    %p125 = scmp.ne.s32.totalorder %s110, %s124
    %p126 = scmp.eq.s32.totalorder %s18, 0
    %p127 = por %p125, %p126
    %s129 = sadd.s32 %s128, 1
    %p132 = scmp.eq.s32.totalorder %s12, 1
    %p133 = scmp.ne.s32.totalorder %s128, %s130
    %p134 = scmp.eq.s32.totalorder %s12, 0
    %p135 = por %p133, %p134
    %p136 = scmp.ne.s32.totalorder %s128, %s130
    %p137 = scmp.eq.s32.totalorder %s17, 1
    %p138 = por %p136, %p137
    %p139 = scmp.ne.s32.totalorder %s130, %s131
    %p140 = scmp.eq.s32.totalorder %s17, 0
    %p141 = por %p139, %p140
    %p142 = scmp.ne.s32.totalorder %s130, %s131
    %p143 = scmp.eq.s32.totalorder %s18, 1
    %p144 = por %p142, %p143
    %p146 = scmp.ne.s32.totalorder %s131, %s145
    %p147 = scmp.eq.s32.totalorder %s18, 0
    %p148 = por %p146, %p147
    %s150 = sadd.s32 %s149, 1
    %p153 = scmp.eq.s32.totalorder %s12, 1
    %p154 = scmp.ne.s32.totalorder %s149, %s151
    %p155 = scmp.eq.s32.totalorder %s12, 0
    %p156 = por %p154, %p155
    %p157 = scmp.ne.s32.totalorder %s149, %s151
    %p158 = scmp.eq.s32.totalorder %s17, 1
    %p159 = por %p157, %p158
    %p160 = scmp.ne.s32.totalorder %s151, %s152
    %p161 = scmp.eq.s32.totalorder %s17, 0
    %p162 = por %p160, %p161
    %p163 = scmp.ne.s32.totalorder %s151, %s152
    %p164 = scmp.eq.s32.totalorder %s18, 1
    %p165 = por %p163, %p164
    %p167 = scmp.ne.s32.totalorder %s152, %s166
    %p168 = scmp.eq.s32.totalorder %s18, 0
    %p169 = por %p167, %p168
    %s170 = ssub.s32 %s19, %s31
    %s171 = ssub.s32 %s20, %s27
    %s172 = sor.u32 %s170, %s171
    %p173 = scmp.eq.s32.totalorder %s172, 0
    %s175 = sadd.s32 %s174, 1
    %s176 = scalar_select %p173, %s174, %s175
    %p179 = pneg %p173
    %p180 = scmp.eq.s32.totalorder %s12, 1
    %p181 = por %p179, %p180
    %p182 = scmp.ne.s32.totalorder %s174, %s177
    %p183 = scmp.eq.s32.totalorder %s12, 0
    %p184 = por %p182, %p183
    %p185 = scmp.ne.s32.totalorder %s174, %s177
    %p186 = scmp.eq.s32.totalorder %s17, 1
    %p187 = por %p185, %p186
    %p188 = scmp.ne.s32.totalorder %s177, %s178
    %p189 = scmp.eq.s32.totalorder %s17, 0
    %p190 = por %p188, %p189
    %p191 = scmp.ne.s32.totalorder %s177, %s178
    %p192 = scmp.eq.s32.totalorder %s18, 1
    %p193 = por %p191, %p192
    %p195 = scmp.ne.s32.totalorder %s178, %s194
    %p196 = scmp.eq.s32.totalorder %s18, 0
    %p197 = por %p195, %p196
    %p198 = scmp.le.s32.totalorder 1, %s12
    %p199 = scmp.lt.s32.totalorder %s12, 3
    %p200 = pnand %p198, %p199
    %p201 = pneg %p200
    // Predicated region
    $region9: #{tpu_custom_call.1} parent=5 // pred_check
      _
    $region10: #{tpu_custom_call.1} parent=5 // pred_check_branch
      %203 = sbr.rel (%p200) target = $region12
    $region11: #{tpu_custom_call.1} parent=5 // pred_region
      %s204 = ssub.s32 %s12, 1
      // Predicated region
      $region13: #{tpu_custom_call.1} parent=11 // pred_check
        %p205 = pneg %p99
      $region14: #{tpu_custom_call.1} parent=11 // pred_check_branch
        %207 = sbr.rel (%p205) target = $region16
      $region15: #{tpu_custom_call.1} parent=11 // pred_region
        _
      $region16: #{tpu_custom_call.1} parent=11 // pred_fallthru
        _
      // Predicated region
      $region17: #{tpu_custom_call.1} parent=11 // pred_check
        %p208 = pneg %p120
      $region18: #{tpu_custom_call.1} parent=11 // pred_check_branch
        %210 = sbr.rel (%p208) target = $region20
      $region19: #{tpu_custom_call.1} parent=11 // pred_region
        _
      $region20: #{tpu_custom_call.1} parent=11 // pred_fallthru
        _
      // Predicated region
      $region21: #{tpu_custom_call.1} parent=11 // pred_check
        %p211 = pneg %p141
      $region22: #{tpu_custom_call.1} parent=11 // pred_check_branch
        %213 = sbr.rel (%p211) target = $region24
      $region23: #{tpu_custom_call.1} parent=11 // pred_region
        _
      $region24: #{tpu_custom_call.1} parent=11 // pred_fallthru
        _
      // Predicated region
      $region25: #{tpu_custom_call.1} parent=11 // pred_check
        %p214 = pneg %p162
      $region26: #{tpu_custom_call.1} parent=11 // pred_check_branch
        %216 = sbr.rel (%p214) target = $region28
      $region27: #{tpu_custom_call.1} parent=11 // pred_region
        _
      $region28: #{tpu_custom_call.1} parent=11 // pred_fallthru
        _
    $region12: #{tpu_custom_call.1} parent=5 // pred_fallthru
      _
    %p217 = scmp.lt.s32.totalorder %s12, 2
    // Predicated region
    $region29: #{tpu_custom_call.1} parent=5 // pred_check
      %p218 = pneg %p217
    $region30: #{tpu_custom_call.1} parent=5 // pred_check_branch
      %220 = sbr.rel (%p218) target = $region32
    $region31: #{tpu_custom_call.1} parent=5 // pred_region
      // Predicated region
      $region33: #{tpu_custom_call.1} parent=31 // pred_check
        %p221 = pneg %p46
      $region34: #{tpu_custom_call.1} parent=31 // pred_check_branch
        %223 = sbr.rel (%p221) target = $region36
      $region35: #{tpu_custom_call.1} parent=31 // pred_region
        %s224 = smul.u32 8, %s20
        %p225 = scmp.lt.s32.totalorder %s19, 1
        %s226 = scalar_select %p225, %s19, 1
        %p227 = scmp.lt.s32.totalorder %s224, 7
        %s228 = scalar_select %p227, %s224, 7
        %s229 = smul.addr %s226, 8
        %s230 = sadd.s32 %s228, %s229
        %s231 = smul.addr %s230, 4
        %s232 = scalar_lea.vmem %s0, %s231
        %s233 = smul.u32 8, %s20
      $region36: #{tpu_custom_call.1} parent=31 // pred_fallthru
        _
      // Predicated region
      $region37: #{tpu_custom_call.1} parent=31 // pred_check
        %p234 = pneg %p72
      $region38: #{tpu_custom_call.1} parent=31 // pred_check_branch
        %236 = sbr.rel (%p234) target = $region40
      $region39: #{tpu_custom_call.1} parent=31 // pred_region
        %p237 = scmp.lt.s32.totalorder %s19, 1
        %s238 = scalar_select %p237, %s19, 1
        %s239 = smul.addr %s238, 8
        %s240 = smul.addr %s239, 4
        %s241 = scalar_lea.vmem %s1, %s240
      $region40: #{tpu_custom_call.1} parent=31 // pred_fallthru
        _
    $region32: #{tpu_custom_call.1} parent=5 // pred_fallthru
      _
    %p242 = scmp.le.s32.totalorder 1, %s12
    %p243 = scmp.lt.s32.totalorder %s12, 3
    %p244 = pnand %p242, %p243
    %p245 = pneg %p244
    // Predicated region
    $region41: #{tpu_custom_call.1} parent=5 // pred_check
      _
    $region42: #{tpu_custom_call.1} parent=5 // pred_check_branch
      %247 = sbr.rel (%p244) target = $region44
    $region43: #{tpu_custom_call.1} parent=5 // pred_region
      %s248 = ssub.s32 %s12, 1
      %s249 = smul.u32 8, %s22
      %p250 = scmp.lt.s32.totalorder %s21, 1
      %s251 = scalar_select %p250, %s21, 1
      %p252 = scmp.lt.s32.totalorder %s249, 7
      %s253 = scalar_select %p252, %s249, 7
      %s254 = smul.addr %s251, 8
      %s255 = sadd.s32 %s253, %s254
      %s256 = smul.addr %s255, 4
      %s257 = scalar_lea.vmem %s0, %s256
      %p258 = pneg %p52
      %p259 = pneg %p49
      %p260 = scmp.lt.s32.totalorder %s21, 1
      %s261 = scalar_select %p260, %s21, 1
      %s262 = smul.addr %s261, 8
      %s263 = smul.addr %s262, 4
      %s264 = scalar_lea.vmem %s1, %s263
      %p265 = pneg %p78
      %p266 = pneg %p75
      %p267 = pneg %p99
      %p268 = pneg %p96
      %p269 = pneg %p120
      %p270 = pneg %p117
      %p271 = pneg %p141
      %p272 = pneg %p138
      %p273 = pneg %p162
      %p274 = pneg %p159
      %p275 = pneg %p190
      %p276 = pneg %p187
      %s277 = smul.u32 8, %s22
      %p278 = scmp.lt.s32.totalorder %s21, 1
      %s279 = scalar_select %p278, %s21, 1
      %p280 = scmp.lt.s32.totalorder %s277, 7
      %s281 = scalar_select %p280, %s277, 7
      %s282 = smul.addr %s279, 8
      %s283 = sadd.s32 %s281, %s282
      %s284 = smul.addr %s283, 8
      %s285 = scalar_lea.vmem %s6, %s284
      %s286 = smul.u32 8, %s22
      %p287 = scmp.lt.s32.totalorder %s21, 1
      %s288 = scalar_select %p287, %s21, 1
      %p289 = scmp.lt.s32.totalorder %s286, 7
      %s290 = scalar_select %p289, %s286, 7
      %s291 = smul.addr %s288, 8
      %s292 = sadd.s32 %s290, %s291
      %s293 = smul.addr %s292, 4
      %s294 = scalar_lea.vmem %s0, %s293
      %s295 = smul.u32 8, %s22
      %p296 = scmp.lt.s32.totalorder %s21, 1
      %s297 = scalar_select %p296, %s21, 1
      %s298 = smul.addr %s297, 8
      %s299 = smul.addr %s298, 4
      %s300 = scalar_lea.vmem %s1, %s299
      %s301 = smul.u32 8, %s22
      %p302 = scmp.lt.s32.totalorder %s21, 1
      %s303 = scalar_select %p302, %s21, 1
      %p304 = scmp.lt.s32.totalorder %s301, 7
      %s305 = scalar_select %p304, %s301, 7
      %s306 = smul.addr %s303, 8
      %s307 = sadd.s32 %s305, %s306
      %s308 = smul.addr %s307, 8
      %s309 = scalar_lea.vmem %s6, %s308
      %s310 = smul.u32 8, %s22
      %v312 = vld [vmem:[%s2] sm:$0x1]
      %p313 = scmp.eq.s32.totalorder %s22, 0
      // Predicated region
      $region45: #{tpu_custom_call.1} parent=43 // pred_check
        %p314 = pneg %p313
      $region46: #{tpu_custom_call.1} parent=43 // pred_check_branch
        %316 = sbr.rel (%p314) target = $region48
      $region47: #{tpu_custom_call.1} parent=43 // pred_region
        %v317 = vld [vmem:[%s300] sm:$0xf]
        %v318 = vld [vmem:[%s300 + $0x4] sm:$0xf]
        %v319 = vld [vmem:[%s300 + $0x8] sm:$0xf]
        %v320 = vld [vmem:[%s300 + $0xc] sm:$0xf]
        %v321 = vld [vmem:[%s300 + $0x10] sm:$0xf]
        %v322 = vld [vmem:[%s300 + $0x14] sm:$0xf]
        %v323 = vld [vmem:[%s300 + $0x18] sm:$0xf]
        %v324 = vld [vmem:[%s300 + $0x1c] sm:$0xf]
        %v325 = vunpack.c.l.bf16 %v317
        %v326 = vunpack.c.l.bf16 %v318
        %v327 = vunpack.c.l.bf16 %v319
        %v328 = vunpack.c.l.bf16 %v320
        %v329 = vunpack.c.l.bf16 %v321
        %v330 = vunpack.c.l.bf16 %v322
        %v331 = vunpack.c.l.bf16 %v323
        %v332 = vunpack.c.l.bf16 %v324
        %v333 = vmul.f32 %v325, %v325
        %v334 = vmul.f32 %v326, %v326
        %v335 = vmul.f32 %v327, %v327
        %v336 = vmul.f32 %v328, %v328
        %v337 = vmul.f32 %v329, %v329
        %v338 = vmul.f32 %v330, %v330
        %v339 = vmul.f32 %v331, %v331
        %v340 = vmul.f32 %v332, %v332
        %vm341 = vcmask 64512
        %v342 = vsel %vm341, %v333, 0.0
        %343 = vadd.xlane.f32.xlu0 %v342
        %v344 = vpop.xlane.xlu0 %343
        %v345 = vsel %vm341, %v334, 0.0
        %346 = vadd.xlane.f32.xlu0 %v345
        %v347 = vpop.xlane.xlu0 %346
        %v348 = vsel %vm341, %v335, 0.0
        %349 = vadd.xlane.f32.xlu0 %v348
        %v350 = vpop.xlane.xlu0 %349
        %v351 = vsel %vm341, %v336, 0.0
        %352 = vadd.xlane.f32.xlu0 %v351
        %v353 = vpop.xlane.xlu0 %352
        %v354 = vsel %vm341, %v337, 0.0
        %355 = vadd.xlane.f32.xlu0 %v354
        %v356 = vpop.xlane.xlu0 %355
        %v357 = vsel %vm341, %v338, 0.0
        %358 = vadd.xlane.f32.xlu0 %v357
        %v359 = vpop.xlane.xlu0 %358
        %v360 = vsel %vm341, %v339, 0.0
        %361 = vadd.xlane.f32.xlu0 %v360
        %v362 = vpop.xlane.xlu0 %361
        %v363 = vsel %vm341, %v340, 0.0
        %364 = vadd.xlane.f32.xlu0 %v363
        %v365 = vpop.xlane.xlu0 %364
        %v366 = vmax.f32 %v344, 1e-24
        %v367 = vmax.f32 %v347, 1e-24
        %v368 = vmax.f32 %v350, 1e-24
        %v369 = vmax.f32 %v353, 1e-24
        %v370 = vmax.f32 %v356, 1e-24
        %v371 = vmax.f32 %v359, 1e-24
        %v372 = vmax.f32 %v362, 1e-24
        %v373 = vmax.f32 %v365, 1e-24
        %v374 = vrsqrt.pop %v366
        %v375 = vrsqrt.pop %v367
        %v376 = vrsqrt.pop %v368
        %v377 = vrsqrt.pop %v369
        %v378 = vrsqrt.pop %v370
        %v379 = vrsqrt.pop %v371
        %v380 = vrsqrt.pop %v372
        %v381 = vrsqrt.pop %v373
        %v382 = vmul.f32 %v325, %v374
        %v383 = vmul.f32 %v326, %v375
        %v384 = vmul.f32 %v327, %v376
        %v385 = vmul.f32 %v328, %v377
        %v386 = vmul.f32 %v329, %v378
        %v387 = vmul.f32 %v330, %v379
        %v388 = vmul.f32 %v331, %v380
        %v389 = vmul.f32 %v332, %v381
        %v391 = vlaneseq
        %v392 = vshrl.u32 %v391, 7
        %v393 = vsub.s32 0, %v392
        %v394 = vrot.slane %v312, %v393
        %v396 = vmul.f32 %v382, %v394
        %v397 = vmul.f32 %v383, %v394
        %v398 = vmul.f32 %v384, %v394
        %v399 = vmul.f32 %v385, %v394
        %v400 = vmul.f32 %v386, %v394
        %v401 = vmul.f32 %v387, %v394
        %v402 = vmul.f32 %v388, %v394
        %v403 = vmul.f32 %v389, %v394
        %v404 = vpack.c.bf16 %v397, %v396
        %v405 = vpack.c.bf16 %v399, %v398
        %v406 = vpack.c.bf16 %v401, %v400
        %v407 = vpack.c.bf16 %v403, %v402
        %v408 = vld [vmem:[%s4] sm:$0xf]
        %v410 = vsel %vm341, %v404, 0
        %v413 = vsel %vm341, %v405, 0
        %v416 = vsel %vm341, %v406, 0
        %v419 = vsel %vm341, %v407, 0
        %vm421 = vcmask 1043456
        %v423 = vsel %vm421, %v408, 0
        %425 = vmatprep.subr.bf16.mxu0 0
        %426 = vmatpush1.bf16.msra.mxu0 %v423
        %427 = vmatprep.subr.bf16.mxu0 0
        %428 = vmatpush1.bf16.msra.mxu0 0
        %429 = vmatprep.subr.bf16.mxu0 0
        %430 = vmatpush1.bf16.msra.mxu0 0
        %431 = vmatprep.subr.bf16.mxu0 0
        %432 = vmatpush1.bf16.msra.mxu0 0
        %433 = vmatprep.subr.bf16.mxu0 0
        %434 = vmatpush1.bf16.msra.mxu0 0
        %435 = vmatprep.subr.bf16.mxu0 0
        %436 = vmatpush1.bf16.msra.mxu0 0
        %437 = vmatprep.subr.bf16.mxu0 0
        %438 = vmatpush1.bf16.msra.mxu0 0
        %439 = vmatprep.subr.bf16.mxu0 0
        %440 = vmatpush1.bf16.msra.mxu0 0
        %441 = vmatprep.subr.bf16.mxu0 0
        %442 = vmatpush1.bf16.msra.mxu0 0
        %443 = vmatprep.subr.bf16.mxu0 0
        %444 = vmatpush1.bf16.msra.mxu0 0
        %445 = vmatprep.subr.bf16.mxu0 0
        %446 = vmatpush1.bf16.msra.mxu0 0
        %447 = vmatprep.subr.bf16.mxu0 0
        %448 = vmatpush1.bf16.msra.mxu0 0
        %449 = vmatprep.subr.bf16.mxu0 0
        %450 = vmatpush1.bf16.msra.mxu0 0
        %451 = vmatprep.subr.bf16.mxu0 0
        %452 = vmatpush1.bf16.msra.mxu0 0
        %453 = vmatprep.subr.bf16.mxu0 0
        %454 = vmatpush1.bf16.msra.mxu0 0
        %455 = vmatprep.subr.bf16.mxu0 0
        %456 = vmatpush1.bf16.msra.mxu0 0
        %457 = vmatprep.mubr.bf16.mxu0 0
        %458 = vmatmul.mubr.bf16.gmra.mrb[0].mxu0 %v410
        %v459 = vpop.f32.mrb[0].mxu0
        %v460 = vadd.f32 0.0, %v459
        %v461 = vpop.f32.mrb[0].mxu0
        %v462 = vpop.f32.mrb[0].mxu0
        %v463 = vadd.f32 0.0, %v462
        %v464 = vpop.f32.mrb[0].mxu0
        %465 = vmatprep.mubr.bf16.mxu0 0
        %466 = vmatmul.mubr.bf16.gmra.mrb[0].mxu0 %v413
        %v467 = vpop.f32.mrb[0].mxu0
        %v468 = vadd.f32 0.0, %v467
        %v469 = vpop.f32.mrb[0].mxu0
        %v470 = vpop.f32.mrb[0].mxu0
        %v471 = vadd.f32 0.0, %v470
        %v472 = vpop.f32.mrb[0].mxu0
        %473 = vmatprep.mubr.bf16.mxu0 0
        %474 = vmatmul.mubr.bf16.gmra.mrb[0].mxu0 %v416
        %v475 = vpop.f32.mrb[0].mxu0
        %v476 = vadd.f32 0.0, %v475
        %v477 = vpop.f32.mrb[0].mxu0
        %v478 = vpop.f32.mrb[0].mxu0
        %v479 = vadd.f32 0.0, %v478
        %v480 = vpop.f32.mrb[0].mxu0
        %481 = vmatprep.mubr.bf16.mxu0 0
        %482 = vmatmul.mubr.bf16.gmra.mrb[0].mxu0 %v419
        %v483 = vpop.f32.mrb[0].mxu0
        %v484 = vadd.f32 0.0, %v483
        %v485 = vpop.f32.mrb[0].mxu0
        %v486 = vpop.f32.mrb[0].mxu0
        %v487 = vadd.f32 0.0, %v486
        %v488 = vpop.f32.mrb[0].mxu0
        %489 = vdwg.mxu0
        %v490 = vpack.c.bf16 %v463, %v460
        %v491 = vpack.c.bf16 %v471, %v468
        %v492 = vpack.c.bf16 %v479, %v476
        %v493 = vpack.c.bf16 %v487, %v484
        %vm494 = vcmask 523264
        %495 = vst.msk [vmem:[#allocation2] sm:$0xff] %vm494, %v490
        %496 = vst.msk [vmem:[#allocation2 + $0x8] sm:$0xff] %vm494, %v491
        %497 = vst.msk [vmem:[#allocation2 + $0x10] sm:$0xff] %vm494, %v492
        %498 = vst.msk [vmem:[#allocation2 + $0x18] sm:$0xff] %vm494, %v493
      $region48: #{tpu_custom_call.1} parent=43 // pred_fallthru
        _
      %v499 = vld [vmem:[%s294] sm:$0xf]
      %v500 = vld [vmem:[%s294 + $0x4] sm:$0xf]
      %v501 = vld [vmem:[%s294 + $0x8] sm:$0xf]
      %v502 = vld [vmem:[%s294 + $0xc] sm:$0xf]
      %v503 = vld [vmem:[%s294 + $0x10] sm:$0xf]
      %v504 = vld [vmem:[%s294 + $0x14] sm:$0xf]
      %v505 = vld [vmem:[%s294 + $0x18] sm:$0xf]
      %v506 = vld [vmem:[%s294 + $0x1c] sm:$0xf]
      %v507 = vunpack.c.l.bf16 %v499
      %v508 = vunpack.c.l.bf16 %v500
      %v509 = vunpack.c.l.bf16 %v501
      %v510 = vunpack.c.l.bf16 %v502
      %v511 = vunpack.c.l.bf16 %v503
      %v512 = vunpack.c.l.bf16 %v504
      %v513 = vunpack.c.l.bf16 %v505
      %v514 = vunpack.c.l.bf16 %v506
      %v515 = vmul.f32 %v507, %v507
      %v516 = vmul.f32 %v508, %v508
      %v517 = vmul.f32 %v509, %v509
      %v518 = vmul.f32 %v510, %v510
      %v519 = vmul.f32 %v511, %v511
      %v520 = vmul.f32 %v512, %v512
      %v521 = vmul.f32 %v513, %v513
      %v522 = vmul.f32 %v514, %v514
      %vm523 = vcmask 64512
      %v524 = vsel %vm523, %v515, 0.0
      %525 = vadd.xlane.f32.xlu0 %v524
      %v526 = vpop.xlane.xlu0 %525
      %v527 = vsel %vm523, %v516, 0.0
      %528 = vadd.xlane.f32.xlu0 %v527
      %v529 = vpop.xlane.xlu0 %528
      %v530 = vsel %vm523, %v517, 0.0
      %531 = vadd.xlane.f32.xlu0 %v530
      %v532 = vpop.xlane.xlu0 %531
      %v533 = vsel %vm523, %v518, 0.0
      %534 = vadd.xlane.f32.xlu0 %v533
      %v535 = vpop.xlane.xlu0 %534
      %v536 = vsel %vm523, %v519, 0.0
      %537 = vadd.xlane.f32.xlu0 %v536
      %v538 = vpop.xlane.xlu0 %537
      %v539 = vsel %vm523, %v520, 0.0
      %540 = vadd.xlane.f32.xlu0 %v539
      %v541 = vpop.xlane.xlu0 %540
      %v542 = vsel %vm523, %v521, 0.0
      %543 = vadd.xlane.f32.xlu0 %v542
      %v544 = vpop.xlane.xlu0 %543
      %v545 = vsel %vm523, %v522, 0.0
      %546 = vadd.xlane.f32.xlu0 %v545
      %v547 = vpop.xlane.xlu0 %546
      %v548 = vmax.f32 %v526, 1e-24
      %v549 = vmax.f32 %v529, 1e-24
      %v550 = vmax.f32 %v532, 1e-24
      %v551 = vmax.f32 %v535, 1e-24
      %v552 = vmax.f32 %v538, 1e-24
      %v553 = vmax.f32 %v541, 1e-24
      %v554 = vmax.f32 %v544, 1e-24
      %v555 = vmax.f32 %v547, 1e-24
      %v556 = vrsqrt.pop %v548
      %v557 = vrsqrt.pop %v549
      %v558 = vrsqrt.pop %v550
      %v559 = vrsqrt.pop %v551
      %v560 = vrsqrt.pop %v552
      %v561 = vrsqrt.pop %v553
      %v562 = vrsqrt.pop %v554
      %v563 = vrsqrt.pop %v555
      %v564 = vmul.f32 %v507, %v556
      %v565 = vmul.f32 %v508, %v557
      %v566 = vmul.f32 %v509, %v558
      %v567 = vmul.f32 %v510, %v559
      %v568 = vmul.f32 %v511, %v560
      %v569 = vmul.f32 %v512, %v561
      %v570 = vmul.f32 %v513, %v562
      %v571 = vmul.f32 %v514, %v563
      %v573 = vlaneseq
      %v574 = vshrl.u32 %v573, 7
      %v575 = vsub.s32 0, %v574
      %v576 = vrot.slane %v312, %v575
      %v578 = vmul.f32 %v564, %v576
      %v579 = vmul.f32 %v565, %v576
      %v580 = vmul.f32 %v566, %v576
      %v581 = vmul.f32 %v567, %v576
      %v582 = vmul.f32 %v568, %v576
      %v583 = vmul.f32 %v569, %v576
      %v584 = vmul.f32 %v570, %v576
      %v585 = vmul.f32 %v571, %v576
      %v586 = vpack.c.bf16 %v579, %v578
      %v587 = vpack.c.bf16 %v581, %v580
      %v588 = vpack.c.bf16 %v583, %v582
      %v589 = vpack.c.bf16 %v585, %v584
      %v590 = vld [vmem:[%s3] sm:$0xf]
      %v592 = vsel %vm523, %v586, 0
      %v595 = vsel %vm523, %v587, 0
      %v598 = vsel %vm523, %v588, 0
      %v601 = vsel %vm523, %v589, 0
      %vm603 = vcmask 1043456
      %v605 = vsel %vm603, %v590, 0
      %607 = vmatprep.subr.bf16.mxu0 0
      %608 = vmatpush1.bf16.msra.mxu0 %v605
      %609 = vmatprep.subr.bf16.mxu0 0
      %610 = vmatpush1.bf16.msra.mxu0 0
      %611 = vmatprep.subr.bf16.mxu0 0
      %612 = vmatpush1.bf16.msra.mxu0 0
      %613 = vmatprep.subr.bf16.mxu0 0
      %614 = vmatpush1.bf16.msra.mxu0 0
      %615 = vmatprep.subr.bf16.mxu0 0
      %616 = vmatpush1.bf16.msra.mxu0 0
      %617 = vmatprep.subr.bf16.mxu0 0
      %618 = vmatpush1.bf16.msra.mxu0 0
      %619 = vmatprep.subr.bf16.mxu0 0
      %620 = vmatpush1.bf16.msra.mxu0 0
      %621 = vmatprep.subr.bf16.mxu0 0
      %622 = vmatpush1.bf16.msra.mxu0 0
      %623 = vmatprep.subr.bf16.mxu0 0
      %624 = vmatpush1.bf16.msra.mxu0 0
      %625 = vmatprep.subr.bf16.mxu0 0
      %626 = vmatpush1.bf16.msra.mxu0 0
      %627 = vmatprep.subr.bf16.mxu0 0
      %628 = vmatpush1.bf16.msra.mxu0 0
      %629 = vmatprep.subr.bf16.mxu0 0
      %630 = vmatpush1.bf16.msra.mxu0 0
      %631 = vmatprep.subr.bf16.mxu0 0
      %632 = vmatpush1.bf16.msra.mxu0 0
      %633 = vmatprep.subr.bf16.mxu0 0
      %634 = vmatpush1.bf16.msra.mxu0 0
      %635 = vmatprep.subr.bf16.mxu0 0
      %636 = vmatpush1.bf16.msra.mxu0 0
      %637 = vmatprep.subr.bf16.mxu0 0
      %638 = vmatpush1.bf16.msra.mxu0 0
      %639 = vmatprep.mubr.bf16.mxu0 0
      %640 = vmatmul.mubr.bf16.gmra.mrb[0].mxu0 %v592
      %v641 = vpop.f32.mrb[0].mxu0
      %v642 = vadd.f32 0.0, %v641
      %v643 = vpop.f32.mrb[0].mxu0
      %v644 = vpop.f32.mrb[0].mxu0
      %v645 = vadd.f32 0.0, %v644
      %v646 = vpop.f32.mrb[0].mxu0
      %647 = vmatprep.mubr.bf16.mxu0 0
      %648 = vmatmul.mubr.bf16.gmra.mrb[0].mxu0 %v595
      %v649 = vpop.f32.mrb[0].mxu0
      %v650 = vadd.f32 0.0, %v649
      %v651 = vpop.f32.mrb[0].mxu0
      %v652 = vpop.f32.mrb[0].mxu0
      %v653 = vadd.f32 0.0, %v652
      %v654 = vpop.f32.mrb[0].mxu0
      %655 = vmatprep.mubr.bf16.mxu0 0
      %656 = vmatmul.mubr.bf16.gmra.mrb[0].mxu0 %v598
      %v657 = vpop.f32.mrb[0].mxu0
      %v658 = vadd.f32 0.0, %v657
      %v659 = vpop.f32.mrb[0].mxu0
      %v660 = vpop.f32.mrb[0].mxu0
      %v661 = vadd.f32 0.0, %v660
      %v662 = vpop.f32.mrb[0].mxu0
      %663 = vmatprep.mubr.bf16.mxu0 0
      %664 = vmatmul.mubr.bf16.gmra.mrb[0].mxu0 %v601
      %v665 = vpop.f32.mrb[0].mxu0
      %v666 = vadd.f32 0.0, %v665
      %v667 = vpop.f32.mrb[0].mxu0
      %v668 = vpop.f32.mrb[0].mxu0
      %v669 = vadd.f32 0.0, %v668
      %v670 = vpop.f32.mrb[0].mxu0
      %671 = vdwg.mxu0
      %v672 = vpack.c.bf16 %v645, %v642
      %v673 = vpack.c.bf16 %v653, %v650
      %v674 = vpack.c.bf16 %v661, %v658
      %v675 = vpack.c.bf16 %v669, %v666
      %v676 = vld [vmem:[#allocation2] sm:$0xff]
      %v677 = vld [vmem:[#allocation2 + $0x8] sm:$0xff]
      %v678 = vld [vmem:[#allocation2 + $0x10] sm:$0xff]
      %v679 = vld [vmem:[#allocation2 + $0x18] sm:$0xff]
      %v681 = vsel %vm523, %v672, 0
      %v684 = vsel %vm523, %v673, 0
      %v687 = vsel %vm523, %v674, 0
      %v690 = vsel %vm523, %v675, 0
      %v693 = vsel %vm523, %v676, 0
      %v696 = vsel %vm523, %v677, 0
      %v699 = vsel %vm523, %v678, 0
      %v702 = vsel %vm523, %v679, 0
      %704 = vmatprep.subr.bf16.mxu0 0
      %705 = vmatpush1.bf16.xpose.msra.mxu0 %v693
      %706 = vmatprep.subr.bf16.mxu0 0
      %707 = vmatpush1.bf16.xpose.msra.mxu0 %v696
      %708 = vmatprep.subr.bf16.mxu0 0
      %709 = vmatpush1.bf16.xpose.msra.mxu0 %v699
      %710 = vmatprep.subr.bf16.mxu0 0
      %711 = vmatpush1.bf16.xpose.msra.mxu0 %v702
      %712 = vmatprep.subr.bf16.mxu0 0
      %713 = vmatpush1.bf16.xpose.msra.mxu0 0
      %714 = vmatprep.subr.bf16.mxu0 0
      %715 = vmatpush1.bf16.xpose.msra.mxu0 0
      %716 = vmatprep.subr.bf16.mxu0 0
      %717 = vmatpush1.bf16.xpose.msra.mxu0 0
      %718 = vmatprep.subr.bf16.mxu0 0
      %719 = vmatpush1.bf16.xpose.msra.mxu0 0
      %720 = vmatprep.subr.bf16.mxu0 0
      %721 = vmatpush1.bf16.xpose.msra.mxu0 0
      %722 = vmatprep.subr.bf16.mxu0 0
      %723 = vmatpush1.bf16.xpose.msra.mxu0 0
      %724 = vmatprep.subr.bf16.mxu0 0
      %725 = vmatpush1.bf16.xpose.msra.mxu0 0
      %726 = vmatprep.subr.bf16.mxu0 0
      %727 = vmatpush1.bf16.xpose.msra.mxu0 0
      %728 = vmatprep.subr.bf16.mxu0 0
      %729 = vmatpush1.bf16.xpose.msra.mxu0 0
      %730 = vmatprep.subr.bf16.mxu0 0
      %731 = vmatpush1.bf16.xpose.msra.mxu0 0
      %732 = vmatprep.subr.bf16.mxu0 0
      %733 = vmatpush1.bf16.xpose.msra.mxu0 0
      %734 = vmatprep.subr.bf16.mxu0 0
      %735 = vmatpush1.bf16.xpose.msra.mxu0 0
      %736 = vmatprep.mubr.bf16.mxu0 0
      %737 = vmatmul.mubr.bf16.gmra.mrb[0].mxu0 %v681
      %v738 = vpop.f32.mrb[0].mxu0
      %v739 = vadd.f32 0.0, %v738
      %v740 = vpop.f32.mrb[0].mxu0
      %v741 = vpop.f32.mrb[0].mxu0
      %v742 = vadd.f32 0.0, %v741
      %v743 = vpop.f32.mrb[0].mxu0
      %744 = vmatprep.mubr.bf16.mxu0 0
      %745 = vmatmul.mubr.bf16.gmra.mrb[0].mxu0 %v684
      %v746 = vpop.f32.mrb[0].mxu0
      %v747 = vadd.f32 0.0, %v746
      %v748 = vpop.f32.mrb[0].mxu0
      %v749 = vpop.f32.mrb[0].mxu0
      %v750 = vadd.f32 0.0, %v749
      %v751 = vpop.f32.mrb[0].mxu0
      %752 = vmatprep.mubr.bf16.mxu0 0
      %753 = vmatmul.mubr.bf16.gmra.mrb[0].mxu0 %v687
      %v754 = vpop.f32.mrb[0].mxu0
      %v755 = vadd.f32 0.0, %v754
      %v756 = vpop.f32.mrb[0].mxu0
      %v757 = vpop.f32.mrb[0].mxu0
      %v758 = vadd.f32 0.0, %v757
      %v759 = vpop.f32.mrb[0].mxu0
      %760 = vmatprep.mubr.bf16.mxu0 0
      %761 = vmatmul.mubr.bf16.gmra.mrb[0].mxu0 %v690
      %v762 = vpop.f32.mrb[0].mxu0
      %v763 = vadd.f32 0.0, %v762
      %v764 = vpop.f32.mrb[0].mxu0
      %v765 = vpop.f32.mrb[0].mxu0
      %v766 = vadd.f32 0.0, %v765
      %v767 = vpop.f32.mrb[0].mxu0
      %768 = vdwg.mxu0
      %vm769 = vcmask 523264
      %v770 = vsel %vm769, %v739, -inf
      %771 = vmax.xlane.f32.xlu0 %v770
      %v772 = vpop.xlane.xlu0 %771
      %v773 = vsel %vm769, %v742, -inf
      %774 = vmax.xlane.f32.xlu0 %v773
      %v775 = vpop.xlane.xlu0 %774
      %v776 = vsel %vm769, %v747, -inf
      %777 = vmax.xlane.f32.xlu0 %v776
      %v778 = vpop.xlane.xlu0 %777
      %v779 = vsel %vm769, %v750, -inf
      %780 = vmax.xlane.f32.xlu0 %v779
      %v781 = vpop.xlane.xlu0 %780
      %v782 = vsel %vm769, %v755, -inf
      %783 = vmax.xlane.f32.xlu0 %v782
      %v784 = vpop.xlane.xlu0 %783
      %v785 = vsel %vm769, %v758, -inf
      %786 = vmax.xlane.f32.xlu0 %v785
      %v787 = vpop.xlane.xlu0 %786
      %v788 = vsel %vm769, %v763, -inf
      %789 = vmax.xlane.f32.xlu0 %v788
      %v790 = vpop.xlane.xlu0 %789
      %v791 = vsel %vm769, %v766, -inf
      %792 = vmax.xlane.f32.xlu0 %v791
      %v793 = vpop.xlane.xlu0 %792
      %v794 = vsub.f32 %v739, %v772
      %v795 = vsub.f32 %v742, %v775
      %v796 = vsub.f32 %v747, %v778
      %v797 = vsub.f32 %v750, %v781
      %v798 = vsub.f32 %v755, %v784
      %v799 = vsub.f32 %v758, %v787
      %v800 = vsub.f32 %v763, %v790
      %v801 = vsub.f32 %v766, %v793
      %v802 = vmul.f32 %v794, 1.442695
      %v803 = vpow.pop %v802
      %v804 = vmul.f32 %v795, 1.442695
      %v805 = vpow.pop %v804
      %v806 = vmul.f32 %v796, 1.442695
      %v807 = vpow.pop %v806
      %v808 = vmul.f32 %v797, 1.442695
      %v809 = vpow.pop %v808
      %v810 = vmul.f32 %v798, 1.442695
      %v811 = vpow.pop %v810
      %v812 = vmul.f32 %v799, 1.442695
      %v813 = vpow.pop %v812
      %v814 = vmul.f32 %v800, 1.442695
      %v815 = vpow.pop %v814
      %v816 = vmul.f32 %v801, 1.442695
      %v817 = vpow.pop %v816
      %v818 = vsel %vm769, %v803, 0.0
      %819 = vadd.xlane.f32.xlu0 %v818
      %v820 = vpop.xlane.xlu0 %819
      %v821 = vsel %vm769, %v805, 0.0
      %822 = vadd.xlane.f32.xlu0 %v821
      %v823 = vpop.xlane.xlu0 %822
      %v824 = vsel %vm769, %v807, 0.0
      %825 = vadd.xlane.f32.xlu0 %v824
      %v826 = vpop.xlane.xlu0 %825
      %v827 = vsel %vm769, %v809, 0.0
      %828 = vadd.xlane.f32.xlu0 %v827
      %v829 = vpop.xlane.xlu0 %828
      %v830 = vsel %vm769, %v811, 0.0
      %831 = vadd.xlane.f32.xlu0 %v830
      %v832 = vpop.xlane.xlu0 %831
      %v833 = vsel %vm769, %v813, 0.0
      %834 = vadd.xlane.f32.xlu0 %v833
      %v835 = vpop.xlane.xlu0 %834
      %v836 = vsel %vm769, %v815, 0.0
      %837 = vadd.xlane.f32.xlu0 %v836
      %v838 = vpop.xlane.xlu0 %837
      %v839 = vsel %vm769, %v817, 0.0
      %840 = vadd.xlane.f32.xlu0 %v839
      %v841 = vpop.xlane.xlu0 %840
      %v842 = vrcp.pop %v820
      %v843 = vrcp.pop %v823
      %v844 = vrcp.pop %v826
      %v845 = vrcp.pop %v829
      %v846 = vrcp.pop %v832
      %v847 = vrcp.pop %v835
      %v848 = vrcp.pop %v838
      %v849 = vrcp.pop %v841
      %v850 = vmul.f32 %v803, %v842
      %v851 = vmul.f32 %v805, %v843
      %v852 = vmul.f32 %v807, %v844
      %v853 = vmul.f32 %v809, %v845
      %v854 = vmul.f32 %v811, %v846
      %v855 = vmul.f32 %v813, %v847
      %v856 = vmul.f32 %v815, %v848
      %v857 = vmul.f32 %v817, %v849
      %v858 = vadd.f32 %v850, 1e-08
      %v859 = vadd.f32 %v851, 1e-08
      %v860 = vadd.f32 %v852, 1e-08
      %v861 = vadd.f32 %v853, 1e-08
      %v862 = vadd.f32 %v854, 1e-08
      %v863 = vadd.f32 %v855, 1e-08
      %v864 = vadd.f32 %v856, 1e-08
      %v865 = vadd.f32 %v857, 1e-08
      %v866 = vpack.c.bf16 %v859, %v858
      %v867 = vpack.c.bf16 %v861, %v860
      %v868 = vpack.c.bf16 %v863, %v862
      %v869 = vpack.c.bf16 %v865, %v864
      %874 = vrot.lane.b32.xlu0 %v676, 96
      %v875 = vpop.permute.xlu0 %874
      %876 = vrot.lane.b32.xlu0 %v677, 96
      %v877 = vpop.permute.xlu0 %876
      %878 = vrot.lane.b32.xlu0 %v678, 96
      %v879 = vpop.permute.xlu0 %878
      %880 = vrot.lane.b32.xlu0 %v679, 96
      %v881 = vpop.permute.xlu0 %880
      %v887 = vsel %vm769, %v866, 0
      %v890 = vsel %vm769, %v867, 0
      %v893 = vsel %vm769, %v868, 0
      %v896 = vsel %vm769, %v869, 0
      %898 = vmatprep.subr.bf16.mxu0 0
      %899 = vmatpush1.bf16.msra.mxu0 %v875
      %900 = vmatprep.subr.bf16.mxu0 0
      %901 = vmatpush1.bf16.msra.mxu0 %v877
      %902 = vmatprep.subr.bf16.mxu0 0
      %903 = vmatpush1.bf16.msra.mxu0 %v879
      %904 = vmatprep.subr.bf16.mxu0 0
      %905 = vmatpush1.bf16.msra.mxu0 %v881
      %906 = vmatprep.subr.bf16.mxu0 0
      %907 = vmatpush1.bf16.msra.mxu0 0
      %908 = vmatprep.subr.bf16.mxu0 0
      %909 = vmatpush1.bf16.msra.mxu0 0
      %910 = vmatprep.subr.bf16.mxu0 0
      %911 = vmatpush1.bf16.msra.mxu0 0
      %912 = vmatprep.subr.bf16.mxu0 0
      %913 = vmatpush1.bf16.msra.mxu0 0
      %914 = vmatprep.subr.bf16.mxu0 0
      %915 = vmatpush1.bf16.msra.mxu0 0
      %916 = vmatprep.subr.bf16.mxu0 0
      %917 = vmatpush1.bf16.msra.mxu0 0
      %918 = vmatprep.subr.bf16.mxu0 0
      %919 = vmatpush1.bf16.msra.mxu0 0
      %920 = vmatprep.subr.bf16.mxu0 0
      %921 = vmatpush1.bf16.msra.mxu0 0
      %922 = vmatprep.subr.bf16.mxu0 0
      %923 = vmatpush1.bf16.msra.mxu0 0
      %924 = vmatprep.subr.bf16.mxu0 0
      %925 = vmatpush1.bf16.msra.mxu0 0
      %926 = vmatprep.subr.bf16.mxu0 0
      %927 = vmatpush1.bf16.msra.mxu0 0
      %928 = vmatprep.subr.bf16.mxu0 0
      %929 = vmatpush1.bf16.msra.mxu0 0
      %930 = vmatprep.mubr.bf16.mxu0 0
      %931 = vmatmul.mubr.bf16.gmra.mrb[0].mxu0 %v887
      %v932 = vpop.f32.mrb[0].mxu0
      %v933 = vadd.f32 1e-08, %v932
      %v934 = vpop.f32.mrb[0].mxu0
      %v935 = vpop.f32.mrb[0].mxu0
      %v936 = vadd.f32 1e-08, %v935
      %v937 = vpop.f32.mrb[0].mxu0
      %938 = vmatprep.mubr.bf16.mxu0 0
      %939 = vmatmul.mubr.bf16.gmra.mrb[0].mxu0 %v890
      %v940 = vpop.f32.mrb[0].mxu0
      %v941 = vadd.f32 1e-08, %v940
      %v942 = vpop.f32.mrb[0].mxu0
      %v943 = vpop.f32.mrb[0].mxu0
      %v944 = vadd.f32 1e-08, %v943
      %v945 = vpop.f32.mrb[0].mxu0
      %946 = vmatprep.mubr.bf16.mxu0 0
      %947 = vmatmul.mubr.bf16.gmra.mrb[0].mxu0 %v893
      %v948 = vpop.f32.mrb[0].mxu0
      %v949 = vadd.f32 1e-08, %v948
      %v950 = vpop.f32.mrb[0].mxu0
      %v951 = vpop.f32.mrb[0].mxu0
      %v952 = vadd.f32 1e-08, %v951
      %v953 = vpop.f32.mrb[0].mxu0
      %954 = vmatprep.mubr.bf16.mxu0 0
      %955 = vmatmul.mubr.bf16.gmra.mrb[0].mxu0 %v896
      %v956 = vpop.f32.mrb[0].mxu0
      %v957 = vadd.f32 1e-08, %v956
      %v958 = vpop.f32.mrb[0].mxu0
      %v959 = vpop.f32.mrb[0].mxu0
      %v960 = vadd.f32 1e-08, %v959
      %v961 = vpop.f32.mrb[0].mxu0
      %962 = vdwg.mxu0
      %v963 = vpack.c.bf16 %v936, %v933
      %v964 = vpack.c.bf16 %v944, %v941
      %v965 = vpack.c.bf16 %v952, %v949
      %v966 = vpack.c.bf16 %v960, %v957
      %967 = vst.msk [vmem:[#allocation3] sm:$0xff] %vm523, %v963
      %968 = vst.msk [vmem:[#allocation3 + $0x8] sm:$0xff] %vm523, %v964
      %969 = vst.msk [vmem:[#allocation3 + $0x10] sm:$0xff] %vm523, %v965
      %970 = vst.msk [vmem:[#allocation3 + $0x18] sm:$0xff] %vm523, %v966
      %v971 = vld [vmem:[#allocation2] sm:$0xff]
      %v972 = vld [vmem:[#allocation2 + $0x8] sm:$0xff]
      %v973 = vld [vmem:[#allocation2 + $0x10] sm:$0xff]
      %v974 = vld [vmem:[#allocation2 + $0x18] sm:$0xff]
      %979 = vrot.lane.b32.xlu0 %v672, 120
      %v980 = vpop.permute.xlu0 %979
      %981 = vrot.lane.b32.xlu0 %v673, 120
      %v982 = vpop.permute.xlu0 %981
      %983 = vrot.lane.b32.xlu0 %v674, 120
      %v984 = vpop.permute.xlu0 %983
      %985 = vrot.lane.b32.xlu0 %v675, 120
      %v986 = vpop.permute.xlu0 %985
      %991 = vrot.lane.b32.xlu0 %v971, 120
      %v992 = vpop.permute.xlu0 %991
      %993 = vrot.lane.b32.xlu0 %v972, 120
      %v994 = vpop.permute.xlu0 %993
      %995 = vrot.lane.b32.xlu0 %v973, 120
      %v996 = vpop.permute.xlu0 %995
      %997 = vrot.lane.b32.xlu0 %v974, 120
      %v998 = vpop.permute.xlu0 %997
      %v1000 = vsel %vm523, %v980, 0
      %v1003 = vsel %vm523, %v982, 0
      %v1006 = vsel %vm523, %v984, 0
      %v1009 = vsel %vm523, %v986, 0
      %v1012 = vsel %vm523, %v992, 0
      %v1015 = vsel %vm523, %v994, 0
      %v1018 = vsel %vm523, %v996, 0
      %v1021 = vsel %vm523, %v998, 0
      %1023 = vmatprep.subr.bf16.mxu0 0
      %1024 = vmatpush1.bf16.xpose.msra.mxu0 %v1012
      %1025 = vmatprep.subr.bf16.mxu0 0
      %1026 = vmatpush1.bf16.xpose.msra.mxu0 %v1015
      %1027 = vmatprep.subr.bf16.mxu0 0
      %1028 = vmatpush1.bf16.xpose.msra.mxu0 %v1018
      %1029 = vmatprep.subr.bf16.mxu0 0
      %1030 = vmatpush1.bf16.xpose.msra.mxu0 %v1021
      %1031 = vmatprep.subr.bf16.mxu0 0
      %1032 = vmatpush1.bf16.xpose.msra.mxu0 0
      %1033 = vmatprep.subr.bf16.mxu0 0
      %1034 = vmatpush1.bf16.xpose.msra.mxu0 0
      %1035 = vmatprep.subr.bf16.mxu0 0
      %1036 = vmatpush1.bf16.xpose.msra.mxu0 0
      %1037 = vmatprep.subr.bf16.mxu0 0
      %1038 = vmatpush1.bf16.xpose.msra.mxu0 0
      %1039 = vmatprep.subr.bf16.mxu0 0
      %1040 = vmatpush1.bf16.xpose.msra.mxu0 0
      %1041 = vmatprep.subr.bf16.mxu0 0
      %1042 = vmatpush1.bf16.xpose.msra.mxu0 0
      %1043 = vmatprep.subr.bf16.mxu0 0
      %1044 = vmatpush1.bf16.xpose.msra.mxu0 0
      %1045 = vmatprep.subr.bf16.mxu0 0
      %1046 = vmatpush1.bf16.xpose.msra.mxu0 0
      %1047 = vmatprep.subr.bf16.mxu0 0
      %1048 = vmatpush1.bf16.xpose.msra.mxu0 0
      %1049 = vmatprep.subr.bf16.mxu0 0
      %1050 = vmatpush1.bf16.xpose.msra.mxu0 0
      %1051 = vmatprep.subr.bf16.mxu0 0
      %1052 = vmatpush1.bf16.xpose.msra.mxu0 0
      %1053 = vmatprep.subr.bf16.mxu0 0
      %1054 = vmatpush1.bf16.xpose.msra.mxu0 0
      %1055 = vmatprep.mubr.bf16.mxu0 0
      %1056 = vmatmul.mubr.bf16.gmra.mrb[0].mxu0 %v1000
      %v1057 = vpop.f32.mrb[0].mxu0
      %v1058 = vadd.f32 0.0, %v1057
      %v1059 = vpop.f32.mrb[0].mxu0
      %v1060 = vpop.f32.mrb[0].mxu0
      %v1061 = vadd.f32 0.0, %v1060
      %v1062 = vpop.f32.mrb[0].mxu0
      %1063 = vmatprep.mubr.bf16.mxu0 0
      %1064 = vmatmul.mubr.bf16.gmra.mrb[0].mxu0 %v1003
      %v1065 = vpop.f32.mrb[0].mxu0
      %v1066 = vadd.f32 0.0, %v1065
      %v1067 = vpop.f32.mrb[0].mxu0
      %v1068 = vpop.f32.mrb[0].mxu0
      %v1069 = vadd.f32 0.0, %v1068
      %v1070 = vpop.f32.mrb[0].mxu0
      %1071 = vmatprep.mubr.bf16.mxu0 0
      %1072 = vmatmul.mubr.bf16.gmra.mrb[0].mxu0 %v1006
      %v1073 = vpop.f32.mrb[0].mxu0
      %v1074 = vadd.f32 0.0, %v1073
      %v1075 = vpop.f32.mrb[0].mxu0
      %v1076 = vpop.f32.mrb[0].mxu0
      %v1077 = vadd.f32 0.0, %v1076
      %v1078 = vpop.f32.mrb[0].mxu0
      %1079 = vmatprep.mubr.bf16.mxu0 0
      %1080 = vmatmul.mubr.bf16.gmra.mrb[0].mxu0 %v1009
      %v1081 = vpop.f32.mrb[0].mxu0
      %v1082 = vadd.f32 0.0, %v1081
      %v1083 = vpop.f32.mrb[0].mxu0
      %v1084 = vpop.f32.mrb[0].mxu0
      %v1085 = vadd.f32 0.0, %v1084
      %v1086 = vpop.f32.mrb[0].mxu0
      %1087 = vdwg.mxu0
      %v1088 = vsel %vm769, %v1058, -inf
      %1089 = vmax.xlane.f32.xlu0 %v1088
      %v1090 = vpop.xlane.xlu0 %1089
      %v1091 = vsel %vm769, %v1061, -inf
      %1092 = vmax.xlane.f32.xlu0 %v1091
      %v1093 = vpop.xlane.xlu0 %1092
      %v1094 = vsel %vm769, %v1066, -inf
      %1095 = vmax.xlane.f32.xlu0 %v1094
      %v1096 = vpop.xlane.xlu0 %1095
      %v1097 = vsel %vm769, %v1069, -inf
      %1098 = vmax.xlane.f32.xlu0 %v1097
      %v1099 = vpop.xlane.xlu0 %1098
      %v1100 = vsel %vm769, %v1074, -inf
      %1101 = vmax.xlane.f32.xlu0 %v1100
      %v1102 = vpop.xlane.xlu0 %1101
      %v1103 = vsel %vm769, %v1077, -inf
      %1104 = vmax.xlane.f32.xlu0 %v1103
      %v1105 = vpop.xlane.xlu0 %1104
      %v1106 = vsel %vm769, %v1082, -inf
      %1107 = vmax.xlane.f32.xlu0 %v1106
      %v1108 = vpop.xlane.xlu0 %1107
      %v1109 = vsel %vm769, %v1085, -inf
      %1110 = vmax.xlane.f32.xlu0 %v1109
      %v1111 = vpop.xlane.xlu0 %1110
      %v1112 = vsub.f32 %v1058, %v1090
      %v1113 = vsub.f32 %v1061, %v1093
      %v1114 = vsub.f32 %v1066, %v1096
      %v1115 = vsub.f32 %v1069, %v1099
      %v1116 = vsub.f32 %v1074, %v1102
      %v1117 = vsub.f32 %v1077, %v1105
      %v1118 = vsub.f32 %v1082, %v1108
      %v1119 = vsub.f32 %v1085, %v1111
      %v1120 = vmul.f32 %v1112, 1.442695
      %v1121 = vpow.pop %v1120
      %v1122 = vmul.f32 %v1113, 1.442695
      %v1123 = vpow.pop %v1122
      %v1124 = vmul.f32 %v1114, 1.442695
      %v1125 = vpow.pop %v1124
      %v1126 = vmul.f32 %v1115, 1.442695
      %v1127 = vpow.pop %v1126
      %v1128 = vmul.f32 %v1116, 1.442695
      %v1129 = vpow.pop %v1128
      %v1130 = vmul.f32 %v1117, 1.442695
      %v1131 = vpow.pop %v1130
      %v1132 = vmul.f32 %v1118, 1.442695
      %v1133 = vpow.pop %v1132
      %v1134 = vmul.f32 %v1119, 1.442695
      %v1135 = vpow.pop %v1134
      %v1136 = vsel %vm769, %v1121, 0.0
      %1137 = vadd.xlane.f32.xlu0 %v1136
      %v1138 = vpop.xlane.xlu0 %1137
      %v1139 = vsel %vm769, %v1123, 0.0
      %1140 = vadd.xlane.f32.xlu0 %v1139
      %v1141 = vpop.xlane.xlu0 %1140
      %v1142 = vsel %vm769, %v1125, 0.0
      %1143 = vadd.xlane.f32.xlu0 %v1142
      %v1144 = vpop.xlane.xlu0 %1143
      %v1145 = vsel %vm769, %v1127, 0.0
      %1146 = vadd.xlane.f32.xlu0 %v1145
      %v1147 = vpop.xlane.xlu0 %1146
      %v1148 = vsel %vm769, %v1129, 0.0
      %1149 = vadd.xlane.f32.xlu0 %v1148
      %v1150 = vpop.xlane.xlu0 %1149
      %v1151 = vsel %vm769, %v1131, 0.0
      %1152 = vadd.xlane.f32.xlu0 %v1151
      %v1153 = vpop.xlane.xlu0 %1152
      %v1154 = vsel %vm769, %v1133, 0.0
      %1155 = vadd.xlane.f32.xlu0 %v1154
      %v1156 = vpop.xlane.xlu0 %1155
      %v1157 = vsel %vm769, %v1135, 0.0
      %1158 = vadd.xlane.f32.xlu0 %v1157
      %v1159 = vpop.xlane.xlu0 %1158
      %v1160 = vrcp.pop %v1138
      %v1161 = vrcp.pop %v1141
      %v1162 = vrcp.pop %v1144
      %v1163 = vrcp.pop %v1147
      %v1164 = vrcp.pop %v1150
      %v1165 = vrcp.pop %v1153
      %v1166 = vrcp.pop %v1156
      %v1167 = vrcp.pop %v1159
      %v1168 = vmul.f32 %v1121, %v1160
      %v1169 = vmul.f32 %v1123, %v1161
      %v1170 = vmul.f32 %v1125, %v1162
      %v1171 = vmul.f32 %v1127, %v1163
      %v1172 = vmul.f32 %v1129, %v1164
      %v1173 = vmul.f32 %v1131, %v1165
      %v1174 = vmul.f32 %v1133, %v1166
      %v1175 = vmul.f32 %v1135, %v1167
      %v1176 = vadd.f32 %v1168, 1e-08
      %v1177 = vadd.f32 %v1169, 1e-08
      %v1178 = vadd.f32 %v1170, 1e-08
      %v1179 = vadd.f32 %v1171, 1e-08
      %v1180 = vadd.f32 %v1172, 1e-08
      %v1181 = vadd.f32 %v1173, 1e-08
      %v1182 = vadd.f32 %v1174, 1e-08
      %v1183 = vadd.f32 %v1175, 1e-08
      %v1184 = vpack.c.bf16 %v1177, %v1176
      %v1185 = vpack.c.bf16 %v1179, %v1178
      %v1186 = vpack.c.bf16 %v1181, %v1180
      %v1187 = vpack.c.bf16 %v1183, %v1182
      %1188 = vrot.lane.b32.xlu0 %v971, 88
      %v1189 = vpop.permute.xlu0 %1188
      %1190 = vrot.lane.b32.xlu0 %v972, 88
      %v1191 = vpop.permute.xlu0 %1190
      %1192 = vrot.lane.b32.xlu0 %v973, 88
      %v1193 = vpop.permute.xlu0 %1192
      %1194 = vrot.lane.b32.xlu0 %v974, 88
      %v1195 = vpop.permute.xlu0 %1194
      %v1201 = vsel %vm769, %v1184, 0
      %v1204 = vsel %vm769, %v1185, 0
      %v1207 = vsel %vm769, %v1186, 0
      %v1210 = vsel %vm769, %v1187, 0
      %1212 = vmatprep.subr.bf16.mxu0 0
      %1213 = vmatpush1.bf16.msra.mxu0 %v1189
      %1214 = vmatprep.subr.bf16.mxu0 0
      %1215 = vmatpush1.bf16.msra.mxu0 %v1191
      %1216 = vmatprep.subr.bf16.mxu0 0
      %1217 = vmatpush1.bf16.msra.mxu0 %v1193
      %1218 = vmatprep.subr.bf16.mxu0 0
      %1219 = vmatpush1.bf16.msra.mxu0 %v1195
      %1220 = vmatprep.subr.bf16.mxu0 0
      %1221 = vmatpush1.bf16.msra.mxu0 0
      %1222 = vmatprep.subr.bf16.mxu0 0
      %1223 = vmatpush1.bf16.msra.mxu0 0
      %1224 = vmatprep.subr.bf16.mxu0 0
      %1225 = vmatpush1.bf16.msra.mxu0 0
      %1226 = vmatprep.subr.bf16.mxu0 0
      %1227 = vmatpush1.bf16.msra.mxu0 0
      %1228 = vmatprep.subr.bf16.mxu0 0
      %1229 = vmatpush1.bf16.msra.mxu0 0
      %1230 = vmatprep.subr.bf16.mxu0 0
      %1231 = vmatpush1.bf16.msra.mxu0 0
      %1232 = vmatprep.subr.bf16.mxu0 0
      %1233 = vmatpush1.bf16.msra.mxu0 0
      %1234 = vmatprep.subr.bf16.mxu0 0
      %1235 = vmatpush1.bf16.msra.mxu0 0
      %1236 = vmatprep.subr.bf16.mxu0 0
      %1237 = vmatpush1.bf16.msra.mxu0 0
      %1238 = vmatprep.subr.bf16.mxu0 0
      %1239 = vmatpush1.bf16.msra.mxu0 0
      %1240 = vmatprep.subr.bf16.mxu0 0
      %1241 = vmatpush1.bf16.msra.mxu0 0
      %1242 = vmatprep.subr.bf16.mxu0 0
      %1243 = vmatpush1.bf16.msra.mxu0 0
      %1244 = vmatprep.mubr.bf16.mxu0 0
      %1245 = vmatmul.mubr.bf16.gmra.mrb[0].mxu0 %v1201
      %v1246 = vpop.f32.mrb[0].mxu0
      %v1247 = vadd.f32 1e-08, %v1246
      %v1248 = vpop.f32.mrb[0].mxu0
      %v1249 = vpop.f32.mrb[0].mxu0
      %v1250 = vadd.f32 1e-08, %v1249
      %v1251 = vpop.f32.mrb[0].mxu0
      %1252 = vmatprep.mubr.bf16.mxu0 0
      %1253 = vmatmul.mubr.bf16.gmra.mrb[0].mxu0 %v1204
      %v1254 = vpop.f32.mrb[0].mxu0
      %v1255 = vadd.f32 1e-08, %v1254
      %v1256 = vpop.f32.mrb[0].mxu0
      %v1257 = vpop.f32.mrb[0].mxu0
      %v1258 = vadd.f32 1e-08, %v1257
      %v1259 = vpop.f32.mrb[0].mxu0
      %1260 = vmatprep.mubr.bf16.mxu0 0
      %1261 = vmatmul.mubr.bf16.gmra.mrb[0].mxu0 %v1207
      %v1262 = vpop.f32.mrb[0].mxu0
      %v1263 = vadd.f32 1e-08, %v1262
      %v1264 = vpop.f32.mrb[0].mxu0
      %v1265 = vpop.f32.mrb[0].mxu0
      %v1266 = vadd.f32 1e-08, %v1265
      %v1267 = vpop.f32.mrb[0].mxu0
      %1268 = vmatprep.mubr.bf16.mxu0 0
      %1269 = vmatmul.mubr.bf16.gmra.mrb[0].mxu0 %v1210
      %v1270 = vpop.f32.mrb[0].mxu0
      %v1271 = vadd.f32 1e-08, %v1270
      %v1272 = vpop.f32.mrb[0].mxu0
      %v1273 = vpop.f32.mrb[0].mxu0
      %v1274 = vadd.f32 1e-08, %v1273
      %v1275 = vpop.f32.mrb[0].mxu0
      %1276 = vdwg.mxu0
      %v1277 = vpack.c.bf16 %v1250, %v1247
      %v1278 = vpack.c.bf16 %v1258, %v1255
      %v1279 = vpack.c.bf16 %v1266, %v1263
      %v1280 = vpack.c.bf16 %v1274, %v1271
      %1285 = vrot.lane.b32.xlu0 %v1277, 8
      %v1286 = vpop.permute.xlu0 %1285
      %1287 = vrot.lane.b32.xlu0 %v1278, 8
      %v1288 = vpop.permute.xlu0 %1287
      %1289 = vrot.lane.b32.xlu0 %v1279, 8
      %v1290 = vpop.permute.xlu0 %1289
      %1291 = vrot.lane.b32.xlu0 %v1280, 8
      %v1292 = vpop.permute.xlu0 %1291
      %vm1297 = vcmask 130112
      %1298 = vst.msk [vmem:[#allocation3] sm:$0xff] %vm1297, %v1286
      %1299 = vst.msk [vmem:[#allocation3 + $0x8] sm:$0xff] %vm1297, %v1288
      %1300 = vst.msk [vmem:[#allocation3 + $0x10] sm:$0xff] %vm1297, %v1290
      %1301 = vst.msk [vmem:[#allocation3 + $0x18] sm:$0xff] %vm1297, %v1292
      %v1302 = vld [vmem:[#allocation2] sm:$0xff]
      %v1303 = vld [vmem:[#allocation2 + $0x8] sm:$0xff]
      %v1304 = vld [vmem:[#allocation2 + $0x10] sm:$0xff]
      %v1305 = vld [vmem:[#allocation2 + $0x18] sm:$0xff]
      %1306 = vrot.lane.b32.xlu0 %v672, 112
      %v1307 = vpop.permute.xlu0 %1306
      %1308 = vrot.lane.b32.xlu0 %v673, 112
      %v1309 = vpop.permute.xlu0 %1308
      %1310 = vrot.lane.b32.xlu0 %v674, 112
      %v1311 = vpop.permute.xlu0 %1310
      %1312 = vrot.lane.b32.xlu0 %v675, 112
      %v1313 = vpop.permute.xlu0 %1312
      %1318 = vrot.lane.b32.xlu0 %v1302, 112
      %v1319 = vpop.permute.xlu0 %1318
      %1320 = vrot.lane.b32.xlu0 %v1303, 112
      %v1321 = vpop.permute.xlu0 %1320
      %1322 = vrot.lane.b32.xlu0 %v1304, 112
      %v1323 = vpop.permute.xlu0 %1322
      %1324 = vrot.lane.b32.xlu0 %v1305, 112
      %v1325 = vpop.permute.xlu0 %1324
      %v1327 = vsel %vm523, %v1307, 0
      %v1330 = vsel %vm523, %v1309, 0
      %v1333 = vsel %vm523, %v1311, 0
      %v1336 = vsel %vm523, %v1313, 0
      %v1339 = vsel %vm523, %v1319, 0
      %v1342 = vsel %vm523, %v1321, 0
      %v1345 = vsel %vm523, %v1323, 0
      %v1348 = vsel %vm523, %v1325, 0
      %1350 = vmatprep.subr.bf16.mxu0 0
      %1351 = vmatpush1.bf16.xpose.msra.mxu0 %v1339
      %1352 = vmatprep.subr.bf16.mxu0 0
      %1353 = vmatpush1.bf16.xpose.msra.mxu0 %v1342
      %1354 = vmatprep.subr.bf16.mxu0 0
      %1355 = vmatpush1.bf16.xpose.msra.mxu0 %v1345
      %1356 = vmatprep.subr.bf16.mxu0 0
      %1357 = vmatpush1.bf16.xpose.msra.mxu0 %v1348
      %1358 = vmatprep.subr.bf16.mxu0 0
      %1359 = vmatpush1.bf16.xpose.msra.mxu0 0
      %1360 = vmatprep.subr.bf16.mxu0 0
      %1361 = vmatpush1.bf16.xpose.msra.mxu0 0
      %1362 = vmatprep.subr.bf16.mxu0 0
      %1363 = vmatpush1.bf16.xpose.msra.mxu0 0
      %1364 = vmatprep.subr.bf16.mxu0 0
      %1365 = vmatpush1.bf16.xpose.msra.mxu0 0
      %1366 = vmatprep.subr.bf16.mxu0 0
      %1367 = vmatpush1.bf16.xpose.msra.mxu0 0
      %1368 = vmatprep.subr.bf16.mxu0 0
      %1369 = vmatpush1.bf16.xpose.msra.mxu0 0
      %1370 = vmatprep.subr.bf16.mxu0 0
      %1371 = vmatpush1.bf16.xpose.msra.mxu0 0
      %1372 = vmatprep.subr.bf16.mxu0 0
      %1373 = vmatpush1.bf16.xpose.msra.mxu0 0
      %1374 = vmatprep.subr.bf16.mxu0 0
      %1375 = vmatpush1.bf16.xpose.msra.mxu0 0
      %1376 = vmatprep.subr.bf16.mxu0 0
      %1377 = vmatpush1.bf16.xpose.msra.mxu0 0
      %1378 = vmatprep.subr.bf16.mxu0 0
      %1379 = vmatpush1.bf16.xpose.msra.mxu0 0
      %1380 = vmatprep.subr.bf16.mxu0 0
      %1381 = vmatpush1.bf16.xpose.msra.mxu0 0
      %1382 = vmatprep.mubr.bf16.mxu0 0
      %1383 = vmatmul.mubr.bf16.gmra.mrb[0].mxu0 %v1327
      %v1384 = vpop.f32.mrb[0].mxu0
      %v1385 = vadd.f32 0.0, %v1384
      %v1386 = vpop.f32.mrb[0].mxu0
      %v1387 = vpop.f32.mrb[0].mxu0
      %v1388 = vadd.f32 0.0, %v1387
      %v1389 = vpop.f32.mrb[0].mxu0
      %1390 = vmatprep.mubr.bf16.mxu0 0
      %1391 = vmatmul.mubr.bf16.gmra.mrb[0].mxu0 %v1330
      %v1392 = vpop.f32.mrb[0].mxu0
      %v1393 = vadd.f32 0.0, %v1392
      %v1394 = vpop.f32.mrb[0].mxu0
      %v1395 = vpop.f32.mrb[0].mxu0
      %v1396 = vadd.f32 0.0, %v1395
      %v1397 = vpop.f32.mrb[0].mxu0
      %1398 = vmatprep.mubr.bf16.mxu0 0
      %1399 = vmatmul.mubr.bf16.gmra.mrb[0].mxu0 %v1333
      %v1400 = vpop.f32.mrb[0].mxu0
      %v1401 = vadd.f32 0.0, %v1400
      %v1402 = vpop.f32.mrb[0].mxu0
      %v1403 = vpop.f32.mrb[0].mxu0
      %v1404 = vadd.f32 0.0, %v1403
      %v1405 = vpop.f32.mrb[0].mxu0
      %1406 = vmatprep.mubr.bf16.mxu0 0
      %1407 = vmatmul.mubr.bf16.gmra.mrb[0].mxu0 %v1336
      %v1408 = vpop.f32.mrb[0].mxu0
      %v1409 = vadd.f32 0.0, %v1408
      %v1410 = vpop.f32.mrb[0].mxu0
      %v1411 = vpop.f32.mrb[0].mxu0
      %v1412 = vadd.f32 0.0, %v1411
      %v1413 = vpop.f32.mrb[0].mxu0
      %1414 = vdwg.mxu0
      %v1415 = vsel %vm769, %v1385, -inf
      %1416 = vmax.xlane.f32.xlu0 %v1415
      %v1417 = vpop.xlane.xlu0 %1416
      %v1418 = vsel %vm769, %v1388, -inf
      %1419 = vmax.xlane.f32.xlu0 %v1418
      %v1420 = vpop.xlane.xlu0 %1419
      %v1421 = vsel %vm769, %v1393, -inf
      %1422 = vmax.xlane.f32.xlu0 %v1421
      %v1423 = vpop.xlane.xlu0 %1422
      %v1424 = vsel %vm769, %v1396, -inf
      %1425 = vmax.xlane.f32.xlu0 %v1424
      %v1426 = vpop.xlane.xlu0 %1425
      %v1427 = vsel %vm769, %v1401, -inf
      %1428 = vmax.xlane.f32.xlu0 %v1427
      %v1429 = vpop.xlane.xlu0 %1428
      %v1430 = vsel %vm769, %v1404, -inf
      %1431 = vmax.xlane.f32.xlu0 %v1430
      %v1432 = vpop.xlane.xlu0 %1431
      %v1433 = vsel %vm769, %v1409, -inf
      %1434 = vmax.xlane.f32.xlu0 %v1433
      %v1435 = vpop.xlane.xlu0 %1434
      %v1436 = vsel %vm769, %v1412, -inf
      %1437 = vmax.xlane.f32.xlu0 %v1436
      %v1438 = vpop.xlane.xlu0 %1437
      %v1439 = vsub.f32 %v1385, %v1417
      %v1440 = vsub.f32 %v1388, %v1420
      %v1441 = vsub.f32 %v1393, %v1423
      %v1442 = vsub.f32 %v1396, %v1426
      %v1443 = vsub.f32 %v1401, %v1429
      %v1444 = vsub.f32 %v1404, %v1432
      %v1445 = vsub.f32 %v1409, %v1435
      %v1446 = vsub.f32 %v1412, %v1438
      %v1447 = vmul.f32 %v1439, 1.442695
      %v1448 = vpow.pop %v1447
      %v1449 = vmul.f32 %v1440, 1.442695
      %v1450 = vpow.pop %v1449
      %v1451 = vmul.f32 %v1441, 1.442695
      %v1452 = vpow.pop %v1451
      %v1453 = vmul.f32 %v1442, 1.442695
      %v1454 = vpow.pop %v1453
      %v1455 = vmul.f32 %v1443, 1.442695
      %v1456 = vpow.pop %v1455
      %v1457 = vmul.f32 %v1444, 1.442695
      %v1458 = vpow.pop %v1457
      %v1459 = vmul.f32 %v1445, 1.442695
      %v1460 = vpow.pop %v1459
      %v1461 = vmul.f32 %v1446, 1.442695
      %v1462 = vpow.pop %v1461
      %v1463 = vsel %vm769, %v1448, 0.0
      %1464 = vadd.xlane.f32.xlu0 %v1463
      %v1465 = vpop.xlane.xlu0 %1464
      %v1466 = vsel %vm769, %v1450, 0.0
      %1467 = vadd.xlane.f32.xlu0 %v1466
      %v1468 = vpop.xlane.xlu0 %1467
      %v1469 = vsel %vm769, %v1452, 0.0
      %1470 = vadd.xlane.f32.xlu0 %v1469
      %v1471 = vpop.xlane.xlu0 %1470
      %v1472 = vsel %vm769, %v1454, 0.0
      %1473 = vadd.xlane.f32.xlu0 %v1472
      %v1474 = vpop.xlane.xlu0 %1473
      %v1475 = vsel %vm769, %v1456, 0.0
      %1476 = vadd.xlane.f32.xlu0 %v1475
      %v1477 = vpop.xlane.xlu0 %1476
      %v1478 = vsel %vm769, %v1458, 0.0
      %1479 = vadd.xlane.f32.xlu0 %v1478
      %v1480 = vpop.xlane.xlu0 %1479
      %v1481 = vsel %vm769, %v1460, 0.0
      %1482 = vadd.xlane.f32.xlu0 %v1481
      %v1483 = vpop.xlane.xlu0 %1482
      %v1484 = vsel %vm769, %v1462, 0.0
      %1485 = vadd.xlane.f32.xlu0 %v1484
      %v1486 = vpop.xlane.xlu0 %1485
      %v1487 = vrcp.pop %v1465
      %v1488 = vrcp.pop %v1468
      %v1489 = vrcp.pop %v1471
      %v1490 = vrcp.pop %v1474
      %v1491 = vrcp.pop %v1477
      %v1492 = vrcp.pop %v1480
      %v1493 = vrcp.pop %v1483
      %v1494 = vrcp.pop %v1486
      %v1495 = vmul.f32 %v1448, %v1487
      %v1496 = vmul.f32 %v1450, %v1488
      %v1497 = vmul.f32 %v1452, %v1489
      %v1498 = vmul.f32 %v1454, %v1490
      %v1499 = vmul.f32 %v1456, %v1491
      %v1500 = vmul.f32 %v1458, %v1492
      %v1501 = vmul.f32 %v1460, %v1493
      %v1502 = vmul.f32 %v1462, %v1494
      %v1503 = vadd.f32 %v1495, 1e-08
      %v1504 = vadd.f32 %v1496, 1e-08
      %v1505 = vadd.f32 %v1497, 1e-08
      %v1506 = vadd.f32 %v1498, 1e-08
      %v1507 = vadd.f32 %v1499, 1e-08
      %v1508 = vadd.f32 %v1500, 1e-08
      %v1509 = vadd.f32 %v1501, 1e-08
      %v1510 = vadd.f32 %v1502, 1e-08
      %v1511 = vpack.c.bf16 %v1504, %v1503
      %v1512 = vpack.c.bf16 %v1506, %v1505
      %v1513 = vpack.c.bf16 %v1508, %v1507
      %v1514 = vpack.c.bf16 %v1510, %v1509
      %1515 = vrot.lane.b32.xlu0 %v1302, 80
      %v1516 = vpop.permute.xlu0 %1515
      %1517 = vrot.lane.b32.xlu0 %v1303, 80
      %v1518 = vpop.permute.xlu0 %1517
      %1519 = vrot.lane.b32.xlu0 %v1304, 80
      %v1520 = vpop.permute.xlu0 %1519
      %1521 = vrot.lane.b32.xlu0 %v1305, 80
      %v1522 = vpop.permute.xlu0 %1521
      %v1528 = vsel %vm769, %v1511, 0
      %v1531 = vsel %vm769, %v1512, 0
      %v1534 = vsel %vm769, %v1513, 0
      %v1537 = vsel %vm769, %v1514, 0
      %1539 = vmatprep.subr.bf16.mxu0 0
      %1540 = vmatpush1.bf16.msra.mxu0 %v1516
      %1541 = vmatprep.subr.bf16.mxu0 0
      %1542 = vmatpush1.bf16.msra.mxu0 %v1518
      %1543 = vmatprep.subr.bf16.mxu0 0
      %1544 = vmatpush1.bf16.msra.mxu0 %v1520
      %1545 = vmatprep.subr.bf16.mxu0 0
      %1546 = vmatpush1.bf16.msra.mxu0 %v1522
      %1547 = vmatprep.subr.bf16.mxu0 0
      %1548 = vmatpush1.bf16.msra.mxu0 0
      %1549 = vmatprep.subr.bf16.mxu0 0
      %1550 = vmatpush1.bf16.msra.mxu0 0
      %1551 = vmatprep.subr.bf16.mxu0 0
      %1552 = vmatpush1.bf16.msra.mxu0 0
      %1553 = vmatprep.subr.bf16.mxu0 0
      %1554 = vmatpush1.bf16.msra.mxu0 0
      %1555 = vmatprep.subr.bf16.mxu0 0
      %1556 = vmatpush1.bf16.msra.mxu0 0
      %1557 = vmatprep.subr.bf16.mxu0 0
      %1558 = vmatpush1.bf16.msra.mxu0 0
      %1559 = vmatprep.subr.bf16.mxu0 0
      %1560 = vmatpush1.bf16.msra.mxu0 0
      %1561 = vmatprep.subr.bf16.mxu0 0
      %1562 = vmatpush1.bf16.msra.mxu0 0
      %1563 = vmatprep.subr.bf16.mxu0 0
      %1564 = vmatpush1.bf16.msra.mxu0 0
      %1565 = vmatprep.subr.bf16.mxu0 0
      %1566 = vmatpush1.bf16.msra.mxu0 0
      %1567 = vmatprep.subr.bf16.mxu0 0
      %1568 = vmatpush1.bf16.msra.mxu0 0
      %1569 = vmatprep.subr.bf16.mxu0 0
      %1570 = vmatpush1.bf16.msra.mxu0 0
      %1571 = vmatprep.mubr.bf16.mxu0 0
      %1572 = vmatmul.mubr.bf16.gmra.mrb[0].mxu0 %v1528
      %v1573 = vpop.f32.mrb[0].mxu0
      %v1574 = vadd.f32 1e-08, %v1573
      %v1575 = vpop.f32.mrb[0].mxu0
      %v1576 = vpop.f32.mrb[0].mxu0
      %v1577 = vadd.f32 1e-08, %v1576
      %v1578 = vpop.f32.mrb[0].mxu0
      %1579 = vmatprep.mubr.bf16.mxu0 0
      %1580 = vmatmul.mubr.bf16.gmra.mrb[0].mxu0 %v1531
      %v1581 = vpop.f32.mrb[0].mxu0
      %v1582 = vadd.f32 1e-08, %v1581
      %v1583 = vpop.f32.mrb[0].mxu0
      %v1584 = vpop.f32.mrb[0].mxu0
      %v1585 = vadd.f32 1e-08, %v1584
      %v1586 = vpop.f32.mrb[0].mxu0
      %1587 = vmatprep.mubr.bf16.mxu0 0
      %1588 = vmatmul.mubr.bf16.gmra.mrb[0].mxu0 %v1534
      %v1589 = vpop.f32.mrb[0].mxu0
      %v1590 = vadd.f32 1e-08, %v1589
      %v1591 = vpop.f32.mrb[0].mxu0
      %v1592 = vpop.f32.mrb[0].mxu0
      %v1593 = vadd.f32 1e-08, %v1592
      %v1594 = vpop.f32.mrb[0].mxu0
      %1595 = vmatprep.mubr.bf16.mxu0 0
      %1596 = vmatmul.mubr.bf16.gmra.mrb[0].mxu0 %v1537
      %v1597 = vpop.f32.mrb[0].mxu0
      %v1598 = vadd.f32 1e-08, %v1597
      %v1599 = vpop.f32.mrb[0].mxu0
      %v1600 = vpop.f32.mrb[0].mxu0
      %v1601 = vadd.f32 1e-08, %v1600
      %v1602 = vpop.f32.mrb[0].mxu0
      %1603 = vdwg.mxu0
      %v1604 = vpack.c.bf16 %v1577, %v1574
      %v1605 = vpack.c.bf16 %v1585, %v1582
      %v1606 = vpack.c.bf16 %v1593, %v1590
      %v1607 = vpack.c.bf16 %v1601, %v1598
      %1612 = vrot.lane.b32.xlu0 %v1604, 16
      %v1613 = vpop.permute.xlu0 %1612
      %1614 = vrot.lane.b32.xlu0 %v1605, 16
      %v1615 = vpop.permute.xlu0 %1614
      %1616 = vrot.lane.b32.xlu0 %v1606, 16
      %v1617 = vpop.permute.xlu0 %1616
      %1618 = vrot.lane.b32.xlu0 %v1607, 16
      %v1619 = vpop.permute.xlu0 %1618
      %vm1624 = vcmask 195712
      %1625 = vst.msk [vmem:[#allocation3] sm:$0xff] %vm1624, %v1613
      %1626 = vst.msk [vmem:[#allocation3 + $0x8] sm:$0xff] %vm1624, %v1615
      %1627 = vst.msk [vmem:[#allocation3 + $0x10] sm:$0xff] %vm1624, %v1617
      %1628 = vst.msk [vmem:[#allocation3 + $0x18] sm:$0xff] %vm1624, %v1619
      %v1629 = vld [vmem:[#allocation2] sm:$0xff]
      %v1630 = vld [vmem:[#allocation2 + $0x8] sm:$0xff]
      %v1631 = vld [vmem:[#allocation2 + $0x10] sm:$0xff]
      %v1632 = vld [vmem:[#allocation2 + $0x18] sm:$0xff]
      %1633 = vrot.lane.b32.xlu0 %v672, 104
      %v1634 = vpop.permute.xlu0 %1633
      %1635 = vrot.lane.b32.xlu0 %v673, 104
      %v1636 = vpop.permute.xlu0 %1635
      %1637 = vrot.lane.b32.xlu0 %v674, 104
      %v1638 = vpop.permute.xlu0 %1637
      %1639 = vrot.lane.b32.xlu0 %v675, 104
      %v1640 = vpop.permute.xlu0 %1639
      %1645 = vrot.lane.b32.xlu0 %v1629, 104
      %v1646 = vpop.permute.xlu0 %1645
      %1647 = vrot.lane.b32.xlu0 %v1630, 104
      %v1648 = vpop.permute.xlu0 %1647
      %1649 = vrot.lane.b32.xlu0 %v1631, 104
      %v1650 = vpop.permute.xlu0 %1649
      %1651 = vrot.lane.b32.xlu0 %v1632, 104
      %v1652 = vpop.permute.xlu0 %1651
      %v1654 = vsel %vm523, %v1634, 0
      %v1657 = vsel %vm523, %v1636, 0
      %v1660 = vsel %vm523, %v1638, 0
      %v1663 = vsel %vm523, %v1640, 0
      %v1666 = vsel %vm523, %v1646, 0
      %v1669 = vsel %vm523, %v1648, 0
      %v1672 = vsel %vm523, %v1650, 0
      %v1675 = vsel %vm523, %v1652, 0
      %1677 = vmatprep.subr.bf16.mxu0 0
      %1678 = vmatpush1.bf16.xpose.msra.mxu0 %v1666
      %1679 = vmatprep.subr.bf16.mxu0 0
      %1680 = vmatpush1.bf16.xpose.msra.mxu0 %v1669
      %1681 = vmatprep.subr.bf16.mxu0 0
      %1682 = vmatpush1.bf16.xpose.msra.mxu0 %v1672
      %1683 = vmatprep.subr.bf16.mxu0 0
      %1684 = vmatpush1.bf16.xpose.msra.mxu0 %v1675
      %1685 = vmatprep.subr.bf16.mxu0 0
      %1686 = vmatpush1.bf16.xpose.msra.mxu0 0
      %1687 = vmatprep.subr.bf16.mxu0 0
      %1688 = vmatpush1.bf16.xpose.msra.mxu0 0
      %1689 = vmatprep.subr.bf16.mxu0 0
      %1690 = vmatpush1.bf16.xpose.msra.mxu0 0
      %1691 = vmatprep.subr.bf16.mxu0 0
      %1692 = vmatpush1.bf16.xpose.msra.mxu0 0
      %1693 = vmatprep.subr.bf16.mxu0 0
      %1694 = vmatpush1.bf16.xpose.msra.mxu0 0
      %1695 = vmatprep.subr.bf16.mxu0 0
      %1696 = vmatpush1.bf16.xpose.msra.mxu0 0
      %1697 = vmatprep.subr.bf16.mxu0 0
      %1698 = vmatpush1.bf16.xpose.msra.mxu0 0
      %1699 = vmatprep.subr.bf16.mxu0 0
      %1700 = vmatpush1.bf16.xpose.msra.mxu0 0
      %1701 = vmatprep.subr.bf16.mxu0 0
      %1702 = vmatpush1.bf16.xpose.msra.mxu0 0
      %1703 = vmatprep.subr.bf16.mxu0 0
      %1704 = vmatpush1.bf16.xpose.msra.mxu0 0
      %1705 = vmatprep.subr.bf16.mxu0 0
      %1706 = vmatpush1.bf16.xpose.msra.mxu0 0
      %1707 = vmatprep.subr.bf16.mxu0 0
      %1708 = vmatpush1.bf16.xpose.msra.mxu0 0
      %1709 = vmatprep.mubr.bf16.mxu0 0
      %1710 = vmatmul.mubr.bf16.gmra.mrb[0].mxu0 %v1654
      %v1711 = vpop.f32.mrb[0].mxu0
      %v1712 = vadd.f32 0.0, %v1711
      %v1713 = vpop.f32.mrb[0].mxu0
      %v1714 = vpop.f32.mrb[0].mxu0
      %v1715 = vadd.f32 0.0, %v1714
      %v1716 = vpop.f32.mrb[0].mxu0
      %1717 = vmatprep.mubr.bf16.mxu0 0
      %1718 = vmatmul.mubr.bf16.gmra.mrb[0].mxu0 %v1657
      %v1719 = vpop.f32.mrb[0].mxu0
      %v1720 = vadd.f32 0.0, %v1719
      %v1721 = vpop.f32.mrb[0].mxu0
      %v1722 = vpop.f32.mrb[0].mxu0
      %v1723 = vadd.f32 0.0, %v1722
      %v1724 = vpop.f32.mrb[0].mxu0
      %1725 = vmatprep.mubr.bf16.mxu0 0
      %1726 = vmatmul.mubr.bf16.gmra.mrb[0].mxu0 %v1660
      %v1727 = vpop.f32.mrb[0].mxu0
      %v1728 = vadd.f32 0.0, %v1727
      %v1729 = vpop.f32.mrb[0].mxu0
      %v1730 = vpop.f32.mrb[0].mxu0
      %v1731 = vadd.f32 0.0, %v1730
      %v1732 = vpop.f32.mrb[0].mxu0
      %1733 = vmatprep.mubr.bf16.mxu0 0
      %1734 = vmatmul.mubr.bf16.gmra.mrb[0].mxu0 %v1663
      %v1735 = vpop.f32.mrb[0].mxu0
      %v1736 = vadd.f32 0.0, %v1735
      %v1737 = vpop.f32.mrb[0].mxu0
      %v1738 = vpop.f32.mrb[0].mxu0
      %v1739 = vadd.f32 0.0, %v1738
      %v1740 = vpop.f32.mrb[0].mxu0
      %1741 = vdwg.mxu0
      %v1742 = vsel %vm769, %v1712, -inf
      %1743 = vmax.xlane.f32.xlu0 %v1742
      %v1744 = vpop.xlane.xlu0 %1743
      %v1745 = vsel %vm769, %v1715, -inf
      %1746 = vmax.xlane.f32.xlu0 %v1745
      %v1747 = vpop.xlane.xlu0 %1746
      %v1748 = vsel %vm769, %v1720, -inf
      %1749 = vmax.xlane.f32.xlu0 %v1748
      %v1750 = vpop.xlane.xlu0 %1749
      %v1751 = vsel %vm769, %v1723, -inf
      %1752 = vmax.xlane.f32.xlu0 %v1751
      %v1753 = vpop.xlane.xlu0 %1752
      %v1754 = vsel %vm769, %v1728, -inf
      %1755 = vmax.xlane.f32.xlu0 %v1754
      %v1756 = vpop.xlane.xlu0 %1755
      %v1757 = vsel %vm769, %v1731, -inf
      %1758 = vmax.xlane.f32.xlu0 %v1757
      %v1759 = vpop.xlane.xlu0 %1758
      %v1760 = vsel %vm769, %v1736, -inf
      %1761 = vmax.xlane.f32.xlu0 %v1760
      %v1762 = vpop.xlane.xlu0 %1761
      %v1763 = vsel %vm769, %v1739, -inf
      %1764 = vmax.xlane.f32.xlu0 %v1763
      %v1765 = vpop.xlane.xlu0 %1764
      %v1766 = vsub.f32 %v1712, %v1744
      %v1767 = vsub.f32 %v1715, %v1747
      %v1768 = vsub.f32 %v1720, %v1750
      %v1769 = vsub.f32 %v1723, %v1753
      %v1770 = vsub.f32 %v1728, %v1756
      %v1771 = vsub.f32 %v1731, %v1759
      %v1772 = vsub.f32 %v1736, %v1762
      %v1773 = vsub.f32 %v1739, %v1765
      %v1774 = vmul.f32 %v1766, 1.442695
      %v1775 = vpow.pop %v1774
      %v1776 = vmul.f32 %v1767, 1.442695
      %v1777 = vpow.pop %v1776
      %v1778 = vmul.f32 %v1768, 1.442695
      %v1779 = vpow.pop %v1778
      %v1780 = vmul.f32 %v1769, 1.442695
      %v1781 = vpow.pop %v1780
      %v1782 = vmul.f32 %v1770, 1.442695
      %v1783 = vpow.pop %v1782
      %v1784 = vmul.f32 %v1771, 1.442695
      %v1785 = vpow.pop %v1784
      %v1786 = vmul.f32 %v1772, 1.442695
      %v1787 = vpow.pop %v1786
      %v1788 = vmul.f32 %v1773, 1.442695
      %v1789 = vpow.pop %v1788
      %v1790 = vsel %vm769, %v1775, 0.0
      %1791 = vadd.xlane.f32.xlu0 %v1790
      %v1792 = vpop.xlane.xlu0 %1791
      %v1793 = vsel %vm769, %v1777, 0.0
      %1794 = vadd.xlane.f32.xlu0 %v1793
      %v1795 = vpop.xlane.xlu0 %1794
      %v1796 = vsel %vm769, %v1779, 0.0
      %1797 = vadd.xlane.f32.xlu0 %v1796
      %v1798 = vpop.xlane.xlu0 %1797
      %v1799 = vsel %vm769, %v1781, 0.0
      %1800 = vadd.xlane.f32.xlu0 %v1799
      %v1801 = vpop.xlane.xlu0 %1800
      %v1802 = vsel %vm769, %v1783, 0.0
      %1803 = vadd.xlane.f32.xlu0 %v1802
      %v1804 = vpop.xlane.xlu0 %1803
      %v1805 = vsel %vm769, %v1785, 0.0
      %1806 = vadd.xlane.f32.xlu0 %v1805
      %v1807 = vpop.xlane.xlu0 %1806
      %v1808 = vsel %vm769, %v1787, 0.0
      %1809 = vadd.xlane.f32.xlu0 %v1808
      %v1810 = vpop.xlane.xlu0 %1809
      %v1811 = vsel %vm769, %v1789, 0.0
      %1812 = vadd.xlane.f32.xlu0 %v1811
      %v1813 = vpop.xlane.xlu0 %1812
      %v1814 = vrcp.pop %v1792
      %v1815 = vrcp.pop %v1795
      %v1816 = vrcp.pop %v1798
      %v1817 = vrcp.pop %v1801
      %v1818 = vrcp.pop %v1804
      %v1819 = vrcp.pop %v1807
      %v1820 = vrcp.pop %v1810
      %v1821 = vrcp.pop %v1813
      %v1822 = vmul.f32 %v1775, %v1814
      %v1823 = vmul.f32 %v1777, %v1815
      %v1824 = vmul.f32 %v1779, %v1816
      %v1825 = vmul.f32 %v1781, %v1817
      %v1826 = vmul.f32 %v1783, %v1818
      %v1827 = vmul.f32 %v1785, %v1819
      %v1828 = vmul.f32 %v1787, %v1820
      %v1829 = vmul.f32 %v1789, %v1821
      %v1830 = vadd.f32 %v1822, 1e-08
      %v1831 = vadd.f32 %v1823, 1e-08
      %v1832 = vadd.f32 %v1824, 1e-08
      %v1833 = vadd.f32 %v1825, 1e-08
      %v1834 = vadd.f32 %v1826, 1e-08
      %v1835 = vadd.f32 %v1827, 1e-08
      %v1836 = vadd.f32 %v1828, 1e-08
      %v1837 = vadd.f32 %v1829, 1e-08
      %v1838 = vpack.c.bf16 %v1831, %v1830
      %v1839 = vpack.c.bf16 %v1833, %v1832
      %v1840 = vpack.c.bf16 %v1835, %v1834
      %v1841 = vpack.c.bf16 %v1837, %v1836
      %1842 = vrot.lane.b32.xlu0 %v1629, 72
      %v1843 = vpop.permute.xlu0 %1842
      %1844 = vrot.lane.b32.xlu0 %v1630, 72
      %v1845 = vpop.permute.xlu0 %1844
      %1846 = vrot.lane.b32.xlu0 %v1631, 72
      %v1847 = vpop.permute.xlu0 %1846
      %1848 = vrot.lane.b32.xlu0 %v1632, 72
      %v1849 = vpop.permute.xlu0 %1848
      %v1855 = vsel %vm769, %v1838, 0
      %v1858 = vsel %vm769, %v1839, 0
      %v1861 = vsel %vm769, %v1840, 0
      %v1864 = vsel %vm769, %v1841, 0
      %1866 = vmatprep.subr.bf16.mxu0 0
      %1867 = vmatpush1.bf16.msra.mxu0 %v1843
      %1868 = vmatprep.subr.bf16.mxu0 0
      %1869 = vmatpush1.bf16.msra.mxu0 %v1845
      %1870 = vmatprep.subr.bf16.mxu0 0
      %1871 = vmatpush1.bf16.msra.mxu0 %v1847
      %1872 = vmatprep.subr.bf16.mxu0 0
      %1873 = vmatpush1.bf16.msra.mxu0 %v1849
      %1874 = vmatprep.subr.bf16.mxu0 0
      %1875 = vmatpush1.bf16.msra.mxu0 0
      %1876 = vmatprep.subr.bf16.mxu0 0
      %1877 = vmatpush1.bf16.msra.mxu0 0
      %1878 = vmatprep.subr.bf16.mxu0 0
      %1879 = vmatpush1.bf16.msra.mxu0 0
      %1880 = vmatprep.subr.bf16.mxu0 0
      %1881 = vmatpush1.bf16.msra.mxu0 0
      %1882 = vmatprep.subr.bf16.mxu0 0
      %1883 = vmatpush1.bf16.msra.mxu0 0
      %1884 = vmatprep.subr.bf16.mxu0 0
      %1885 = vmatpush1.bf16.msra.mxu0 0
      %1886 = vmatprep.subr.bf16.mxu0 0
      %1887 = vmatpush1.bf16.msra.mxu0 0
      %1888 = vmatprep.subr.bf16.mxu0 0
      %1889 = vmatpush1.bf16.msra.mxu0 0
      %1890 = vmatprep.subr.bf16.mxu0 0
      %1891 = vmatpush1.bf16.msra.mxu0 0
      %1892 = vmatprep.subr.bf16.mxu0 0
      %1893 = vmatpush1.bf16.msra.mxu0 0
      %1894 = vmatprep.subr.bf16.mxu0 0
      %1895 = vmatpush1.bf16.msra.mxu0 0
      %1896 = vmatprep.subr.bf16.mxu0 0
      %1897 = vmatpush1.bf16.msra.mxu0 0
      %1898 = vmatprep.mubr.bf16.mxu0 0
      %1899 = vmatmul.mubr.bf16.gmra.mrb[0].mxu0 %v1855
      %v1900 = vpop.f32.mrb[0].mxu0
      %v1901 = vadd.f32 1e-08, %v1900
      %v1902 = vpop.f32.mrb[0].mxu0
      %v1903 = vpop.f32.mrb[0].mxu0
      %v1904 = vadd.f32 1e-08, %v1903
      %v1905 = vpop.f32.mrb[0].mxu0
      %1906 = vmatprep.mubr.bf16.mxu0 0
      %1907 = vmatmul.mubr.bf16.gmra.mrb[0].mxu0 %v1858
      %v1908 = vpop.f32.mrb[0].mxu0
      %v1909 = vadd.f32 1e-08, %v1908
      %v1910 = vpop.f32.mrb[0].mxu0
      %v1911 = vpop.f32.mrb[0].mxu0
      %v1912 = vadd.f32 1e-08, %v1911
      %v1913 = vpop.f32.mrb[0].mxu0
      %1914 = vmatprep.mubr.bf16.mxu0 0
      %1915 = vmatmul.mubr.bf16.gmra.mrb[0].mxu0 %v1861
      %v1916 = vpop.f32.mrb[0].mxu0
      %v1917 = vadd.f32 1e-08, %v1916
      %v1918 = vpop.f32.mrb[0].mxu0
      %v1919 = vpop.f32.mrb[0].mxu0
      %v1920 = vadd.f32 1e-08, %v1919
      %v1921 = vpop.f32.mrb[0].mxu0
      %1922 = vmatprep.mubr.bf16.mxu0 0
      %1923 = vmatmul.mubr.bf16.gmra.mrb[0].mxu0 %v1864
      %v1924 = vpop.f32.mrb[0].mxu0
      %v1925 = vadd.f32 1e-08, %v1924
      %v1926 = vpop.f32.mrb[0].mxu0
      %v1927 = vpop.f32.mrb[0].mxu0
      %v1928 = vadd.f32 1e-08, %v1927
      %v1929 = vpop.f32.mrb[0].mxu0
      %1930 = vdwg.mxu0
      %v1931 = vpack.c.bf16 %v1904, %v1901
      %v1932 = vpack.c.bf16 %v1912, %v1909
      %v1933 = vpack.c.bf16 %v1920, %v1917
      %v1934 = vpack.c.bf16 %v1928, %v1925
      %1939 = vrot.lane.b32.xlu0 %v1931, 24
      %v1940 = vpop.permute.xlu0 %1939
      %1941 = vrot.lane.b32.xlu0 %v1932, 24
      %v1942 = vpop.permute.xlu0 %1941
      %1943 = vrot.lane.b32.xlu0 %v1933, 24
      %v1944 = vpop.permute.xlu0 %1943
      %1945 = vrot.lane.b32.xlu0 %v1934, 24
      %v1946 = vpop.permute.xlu0 %1945
      %vm1951 = vcmask 261312
      %1952 = vst.msk [vmem:[#allocation3] sm:$0xff] %vm1951, %v1940
      %1953 = vst.msk [vmem:[#allocation3 + $0x8] sm:$0xff] %vm1951, %v1942
      %1954 = vst.msk [vmem:[#allocation3 + $0x10] sm:$0xff] %vm1951, %v1944
      %1955 = vst.msk [vmem:[#allocation3 + $0x18] sm:$0xff] %vm1951, %v1946
      %v1956 = vld [vmem:[#allocation3] sm:$0xff]
      %v1957 = vld [vmem:[#allocation3 + $0x8] sm:$0xff]
      %v1958 = vld [vmem:[#allocation3 + $0x10] sm:$0xff]
      %v1959 = vld [vmem:[#allocation3 + $0x18] sm:$0xff]
      %v1960 = vld [vmem:[%s5] sm:$0xf]
      %v1961 = vld [vmem:[%s5 + $0x4] sm:$0xf]
      %v1962 = vld [vmem:[%s5 + $0x8] sm:$0xf]
      %v1963 = vld [vmem:[%s5 + $0xc] sm:$0xf]
      %v1968 = vunpack.c.l.b16 %v1960
      %v1969 = vunpack.c.l.b16 %v1961
      %v1970 = vunpack.c.l.b16 %v1962
      %v1971 = vunpack.c.l.b16 %v1963
      %v1972 = vpack.c.b16 %v1969, %v1968
      %v1973 = vpack.c.b16 %v1971, %v1970
      %vm1976 = vcmask 261120
      %v1978 = vsel %vm1976, %v1956, 0
      %v1981 = vsel %vm1976, %v1957, 0
      %v1984 = vsel %vm1976, %v1958, 0
      %v1987 = vsel %vm1976, %v1959, 0
      %1989 = vmatprep.subr.bf16.mxu0 0
      %1990 = vmatpush1.bf16.msra.mxu0 %v1972
      %1991 = vmatprep.subr.bf16.mxu0 0
      %1992 = vmatpush1.bf16.msra.mxu0 %v1973
      %1993 = vmatprep.subr.bf16.mxu0 0
      %1994 = vmatpush1.bf16.msra.mxu0 0
      %1995 = vmatprep.subr.bf16.mxu0 0
      %1996 = vmatpush1.bf16.msra.mxu0 0
      %1997 = vmatprep.subr.bf16.mxu0 0
      %1998 = vmatpush1.bf16.msra.mxu0 0
      %1999 = vmatprep.subr.bf16.mxu0 0
      %2000 = vmatpush1.bf16.msra.mxu0 0
      %2001 = vmatprep.subr.bf16.mxu0 0
      %2002 = vmatpush1.bf16.msra.mxu0 0
      %2003 = vmatprep.subr.bf16.mxu0 0
      %2004 = vmatpush1.bf16.msra.mxu0 0
      %2005 = vmatprep.subr.bf16.mxu0 0
      %2006 = vmatpush1.bf16.msra.mxu0 0
      %2007 = vmatprep.subr.bf16.mxu0 0
      %2008 = vmatpush1.bf16.msra.mxu0 0
      %2009 = vmatprep.subr.bf16.mxu0 0
      %2010 = vmatpush1.bf16.msra.mxu0 0
      %2011 = vmatprep.subr.bf16.mxu0 0
      %2012 = vmatpush1.bf16.msra.mxu0 0
      %2013 = vmatprep.subr.bf16.mxu0 0
      %2014 = vmatpush1.bf16.msra.mxu0 0
      %2015 = vmatprep.subr.bf16.mxu0 0
      %2016 = vmatpush1.bf16.msra.mxu0 0
      %2017 = vmatprep.subr.bf16.mxu0 0
      %2018 = vmatpush1.bf16.msra.mxu0 0
      %2019 = vmatprep.subr.bf16.mxu0 0
      %2020 = vmatpush1.bf16.msra.mxu0 0
      %2021 = vmatprep.mubr.bf16.mxu0 0
      %2022 = vmatmul.mubr.bf16.gmra.mrb[0].mxu0 %v1978
      %v2023 = vpop.f32.mrb[0].mxu0
      %v2024 = vadd.f32 0.0, %v2023
      %v2025 = vpop.f32.mrb[0].mxu0
      %v2026 = vpop.f32.mrb[0].mxu0
      %v2027 = vadd.f32 0.0, %v2026
      %v2028 = vpop.f32.mrb[0].mxu0
      %2029 = vmatprep.mubr.bf16.mxu0 0
      %2030 = vmatmul.mubr.bf16.gmra.mrb[0].mxu0 %v1981
      %v2031 = vpop.f32.mrb[0].mxu0
      %v2032 = vadd.f32 0.0, %v2031
      %v2033 = vpop.f32.mrb[0].mxu0
      %v2034 = vpop.f32.mrb[0].mxu0
      %v2035 = vadd.f32 0.0, %v2034
      %v2036 = vpop.f32.mrb[0].mxu0
      %2037 = vmatprep.mubr.bf16.mxu0 0
      %2038 = vmatmul.mubr.bf16.gmra.mrb[0].mxu0 %v1984
      %v2039 = vpop.f32.mrb[0].mxu0
      %v2040 = vadd.f32 0.0, %v2039
      %v2041 = vpop.f32.mrb[0].mxu0
      %v2042 = vpop.f32.mrb[0].mxu0
      %v2043 = vadd.f32 0.0, %v2042
      %v2044 = vpop.f32.mrb[0].mxu0
      %2045 = vmatprep.mubr.bf16.mxu0 0
      %2046 = vmatmul.mubr.bf16.gmra.mrb[0].mxu0 %v1987
      %v2047 = vpop.f32.mrb[0].mxu0
      %v2048 = vadd.f32 0.0, %v2047
      %v2049 = vpop.f32.mrb[0].mxu0
      %v2050 = vpop.f32.mrb[0].mxu0
      %v2051 = vadd.f32 0.0, %v2050
      %v2052 = vpop.f32.mrb[0].mxu0
      %2053 = vdwg.mxu0
      %2054 = vst.msk [vmem:[%s309] sm:$0xff] %vm523, %v2024
      %2055 = vst.msk [vmem:[%s309 + $0x8] sm:$0xff] %vm523, %v2027
      %2056 = vst.msk [vmem:[%s309 + $0x10] sm:$0xff] %vm523, %v2032
      %2057 = vst.msk [vmem:[%s309 + $0x18] sm:$0xff] %vm523, %v2035
      %2058 = vst.msk [vmem:[%s309 + $0x20] sm:$0xff] %vm523, %v2040
      %2059 = vst.msk [vmem:[%s309 + $0x28] sm:$0xff] %vm523, %v2043
      %2060 = vst.msk [vmem:[%s309 + $0x30] sm:$0xff] %vm523, %v2048
      %2061 = vst.msk [vmem:[%s309 + $0x38] sm:$0xff] %vm523, %v2051
      %s2062 = smul.u32 8, %s22
      %p2063 = scmp.lt.s32.totalorder %s21, 1
      %s2064 = scalar_select %p2063, %s21, 1
      %p2065 = scmp.lt.s32.totalorder %s2062, 7
      %s2066 = scalar_select %p2065, %s2062, 7
      %s2067 = smul.addr %s2064, 8
      %s2068 = sadd.s32 %s2066, %s2067
      %s2069 = smul.addr %s2068, 8
      %s2070 = scalar_lea.vmem %s6, %s2069
      // Predicated region
      $region49: #{tpu_custom_call.1} parent=43 // pred_check
        %p2071 = pneg %p187
      $region50: #{tpu_custom_call.1} parent=43 // pred_check_branch
        %2073 = sbr.rel (%p2071) target = $region52
      $region51: #{tpu_custom_call.1} parent=43 // pred_region
        %s2074 = smul.u32 8, %s22
      $region52: #{tpu_custom_call.1} parent=43 // pred_fallthru
        _
    $region44: #{tpu_custom_call.1} parent=5 // pred_fallthru
      _
    %p2075 = scmp.le.s32.totalorder 2, %s12
    // Predicated region
    $region53: #{tpu_custom_call.1} parent=5 // pred_check
      %p2076 = pneg %p2075
    $region54: #{tpu_custom_call.1} parent=5 // pred_check_branch
      %2078 = sbr.rel (%p2076) target = $region56
    $region55: #{tpu_custom_call.1} parent=5 // pred_region
      %s2079 = ssub.s32 %s12, 2
      // Predicated region
      $region57: #{tpu_custom_call.1} parent=55 // pred_check
        %p2080 = pneg %p193
      $region58: #{tpu_custom_call.1} parent=55 // pred_check_branch
        %2082 = sbr.rel (%p2080) target = $region60
      $region59: #{tpu_custom_call.1} parent=55 // pred_region
        %s2083 = smul.u32 8, %s24
        %p2084 = scmp.lt.s32.totalorder %s23, 1
        %s2085 = scalar_select %p2084, %s23, 1
        %p2086 = scmp.lt.s32.totalorder %s2083, 7
        %s2087 = scalar_select %p2086, %s2083, 7
        %s2088 = smul.addr %s2085, 8
        %s2089 = sadd.s32 %s2087, %s2088
        %s2090 = smul.addr %s2089, 8
        %s2091 = scalar_lea.vmem %s6, %s2090
      $region60: #{tpu_custom_call.1} parent=55 // pred_fallthru
        _
    $region56: #{tpu_custom_call.1} parent=5 // pred_fallthru
      _
  $region6: #{tpu_custom_call.1} parent=0 // loop_footer
    %s16 = sadd.s32 1, %s12
  $region7: #{tpu_custom_call.1} parent=0 // loop_footer_branch
    %11 = sbr.rel target = $region3
  $region8: #{tpu_custom_call.1} parent=0 // loop_exit
    _

</llo_original>
